<compile_context>
chip_gen: v7x
topology: tpu7x:2x2x1
jax: 0.10.0
libtpu: 0.0.40
codegen_flags: <defaults>
</compile_context>

<pallas_src>
import jax
import jax.numpy as jnp
from jax import lax
from jax.experimental import pallas as pl
from jax.experimental.pallas import tpu as pltpu

# ---------------- "GraniteConfig" (small, synthetic, lane-friendly) ----------------
BATCH = 2
SEQ = 8
HIDDEN = 128                           # multiple of 128 -> lane-dense
NUM_HEADS = 4
NUM_KV_HEADS = 2                       # GQA
HEAD_DIM = HIDDEN // NUM_HEADS         # 32
GROUP = NUM_HEADS // NUM_KV_HEADS      # 2
INTERMEDIATE = 256
Q_SIZE = NUM_HEADS * HEAD_DIM          # 128
KV_SIZE = NUM_KV_HEADS * HEAD_DIM      # 64
RMS_EPS = 1e-6
ATTN_MULT = 0.5                        # config.attention_multiplier
RES_MULT = 0.7                         # config.residual_multiplier
ROPE_THETA = 10000.0


def _rmsnorm(x, w, eps):
    var = jnp.mean(x * x, axis=-1, keepdims=True)
    return x * lax.rsqrt(var + eps) * w


# ------------------------- Pallas kernel -------------------------
def granite_decoder_layer_kernel(x_ref, cosq_ref, sinq_ref, coskv_ref, sinkv_ref,
                                 rot_ref, wq_ref, wkv_ref, wo_ref, wgu_ref, wd_ref,
                                 rms1_ref, rms2_ref, out_ref):
    x = x_ref[...]                         # (S, H)  f32
    rot = rot_ref[...]                     # (128, 128) bf16, block-diag signed perm

    # ---- input_layernorm (RMSNorm, f32) ----
    h = _rmsnorm(x, rms1_ref[...], RMS_EPS)
    hb = h.astype(jnp.bfloat16)            # bf16 matmul inputs, f32 accumulation

    # ---- fused lane-dense projections (K=128, N=128) ----
    q = jnp.dot(hb, wq_ref[...], preferred_element_type=jnp.float32)    # (S, 128)
    kv = jnp.dot(hb, wkv_ref[...], preferred_element_type=jnp.float32)  # (S, 128) = K|V

    def rope(t, cos, sin):
        # NeoX rotate-half as one block-diagonal signed-permutation matmul
        # (bf16 operands, f32 accumulation); elementwise part stays f32.
        return t * cos + jnp.dot(t.astype(jnp.bfloat16), rot,
                                 preferred_element_type=jnp.float32) * sin

    q = rope(q, cosq_ref[...], sinq_ref[...])
    kv = rope(kv, coskv_ref[...], sinkv_ref[...])   # V lanes: cos=1, sin=0 -> untouched

    qb = q.astype(jnp.bfloat16)
    kvb = kv.astype(jnp.bfloat16)

    row = lax.broadcasted_iota(jnp.int32, (SEQ, SEQ), 0)
    col = lax.broadcasted_iota(jnp.int32, (SEQ, SEQ), 1)
    causal = col <= row

    # ---- per-head causal attention; heads are 32-lane extracts of the fused slabs.
    # TODO(synk): at production head counts replace this static unroll with a
    # grid axis / lax.fori_loop over head-stacked tensors.
    a_heads = []
    for hq in range(NUM_HEADS):
        kvh = hq // GROUP
        q_h = qb[:, hq * HEAD_DIM:(hq + 1) * HEAD_DIM]                       # (S, D)
        k_h = kvb[:, kvh * HEAD_DIM:(kvh + 1) * HEAD_DIM]                    # (S, D)
        v_h = kvb[:, KV_SIZE + kvh * HEAD_DIM:KV_SIZE + (kvh + 1) * HEAD_DIM]
        s = lax.dot_general(q_h, k_h, (((1,), (1,)), ((), ())),
                            preferred_element_type=jnp.float32) * ATTN_MULT  # (S, S)
        s = jnp.where(causal, s, -1e30)
        m = jnp.max(s, axis=-1, keepdims=True)
        p = jnp.exp(s - m)
        p = p * pl.reciprocal(jnp.sum(p, axis=-1, keepdims=True), approx=True)
        a_heads.append(jnp.dot(p.astype(jnp.bfloat16), v_h,
                               preferred_element_type=jnp.float32))          # (S, D)

    # lane-pack heads at offsets 0/32/64/96 -> a single K=128 o_proj push
    attn = jnp.concatenate(a_heads, axis=-1)                                 # (S, 128)
    attn_out = jnp.dot(attn.astype(jnp.bfloat16), wo_ref[...],
                       preferred_element_type=jnp.float32)                   # (S, H)

    # ---- scaled residual ----
    h1 = x + attn_out * RES_MULT

    # ---- post_attention_layernorm + SwiGLU MLP (merged gate|up) ----
    h2 = _rmsnorm(h1, rms2_ref[...], RMS_EPS)
    gu = jnp.dot(h2.astype(jnp.bfloat16), wgu_ref[...],
                 preferred_element_type=jnp.float32)                         # (S, 2I)
    gate = gu[:, :INTERMEDIATE]          # 256-lane boundary -> vreg-aligned, free
    up = gu[:, INTERMEDIATE:]
    act = gate * lax.logistic(gate) * up                                     # SiluAndMul
    mlp_out = jnp.dot(act.astype(jnp.bfloat16), wd_ref[...],
                      preferred_element_type=jnp.float32)                    # (S, H)

    out_ref[...] = h1 + mlp_out * RES_MULT


def granite_decoder_layer(x, cos_q, sin_q, cos_kv, sin_kv, rot,
                          wq, wkv, wo, wgu, wd, rms1, rms2):
    n_tok, hid = x.shape
    batch = n_tok // SEQ

    def resident(a):  # full-array block, constant index -> stays VMEM-resident
        return pl.BlockSpec(a.shape, lambda b: (0, 0))

    return pl.pallas_call(
        granite_decoder_layer_kernel,
        out_shape=jax.ShapeDtypeStruct(x.shape, x.dtype),
        grid=(batch,),
        in_specs=[pl.BlockSpec((SEQ, hid), lambda b: (b, 0)),
                  resident(cos_q), resident(sin_q), resident(cos_kv), resident(sin_kv),
                  resident(rot), resident(wq), resident(wkv), resident(wo),
                  resident(wgu), resident(wd), resident(rms1), resident(rms2)],
        out_specs=pl.BlockSpec((SEQ, hid), lambda b: (b, 0)),
        compiler_params=pltpu.CompilerParams(
            dimension_semantics=("parallel",)),
    )(x, cos_q, sin_q, cos_kv, sin_kv, rot, wq, wkv, wo, wgu, wd, rms1, rms2)


# ------------------- plain-JAX reference (for check) -------------------
def reference_layer(x, cos_half, sin_half, w_qkv, w_o, w_gu, w_down, rms1, rms2):
    h = _rmsnorm(x, rms1, RMS_EPS)
    qkv = h @ w_qkv
    q = qkv[:, :Q_SIZE].reshape(SEQ, NUM_HEADS, HEAD_DIM)
    k = qkv[:, Q_SIZE:Q_SIZE + KV_SIZE].reshape(SEQ, NUM_KV_HEADS, HEAD_DIM)
    v = qkv[:, Q_SIZE + KV_SIZE:].reshape(SEQ, NUM_KV_HEADS, HEAD_DIM)
    half = HEAD_DIM // 2
    cb, sb = cos_half[:, None, :], sin_half[:, None, :]

    def rope(t):
        t1, t2 = t[..., :half], t[..., half:]
        return jnp.concatenate([t1 * cb - t2 * sb, t2 * cb + t1 * sb], axis=-1)

    q, k = rope(q), rope(k)
    k_e = jnp.repeat(k, GROUP, axis=1)
    v_e = jnp.repeat(v, GROUP, axis=1)
    scores = jnp.einsum('qhd,khd->hqk', q, k_e) * ATTN_MULT
    mask = jnp.tril(jnp.ones((SEQ, SEQ), bool))[None]
    scores = jnp.where(mask, scores, jnp.finfo(jnp.float32).min)
    p = jax.nn.softmax(scores, axis=-1)
    attn = jnp.einsum('hqk,khd->qhd', p, v_e).reshape(SEQ, Q_SIZE)
    h1 = x + (attn @ w_o) * RES_MULT
    h2 = _rmsnorm(h1, rms2, RMS_EPS)
    gu = h2 @ w_gu
    act = jax.nn.silu(gu[:, :INTERMEDIATE]) * gu[:, INTERMEDIATE:]
    return h1 + (act @ w_down) * RES_MULT


if __name__ == "__main__":
    key = jax.random.PRNGKey(0)
    keys = jax.random.split(key, 8)

    x = jax.random.normal(keys[0], (BATCH, SEQ, HIDDEN), jnp.float32)
    w_qkv = 0.05 * jax.random.normal(keys[1], (HIDDEN, Q_SIZE + 2 * KV_SIZE), jnp.float32)
    w_o = 0.05 * jax.random.normal(keys[2], (Q_SIZE, HIDDEN), jnp.float32)
    w_gu = 0.05 * jax.random.normal(keys[3], (HIDDEN, 2 * INTERMEDIATE), jnp.float32)
    w_down = 0.05 * jax.random.normal(keys[4], (INTERMEDIATE, HIDDEN), jnp.float32)
    rms1 = 1.0 + 0.05 * jax.random.normal(keys[5], (1, HIDDEN), jnp.float32)
    rms2 = 1.0 + 0.05 * jax.random.normal(keys[6], (1, HIDDEN), jnp.float32)

    # ---- rotary tables (glue, plain JAX), pre-tiled to lane-dense widths ----
    positions = jnp.arange(SEQ, dtype=jnp.float32)
    half = HEAD_DIM // 2
    inv_freq = 1.0 / (ROPE_THETA ** (jnp.arange(0, HEAD_DIM, 2, dtype=jnp.float32) / HEAD_DIM))
    freqs = positions[:, None] * inv_freq[None, :]                 # (S, D/2)
    cos_half, sin_half = jnp.cos(freqs), jnp.sin(freqs)
    cos_head = jnp.concatenate([cos_half, cos_half], axis=-1)      # (S, D) duplicated halves
    sin_head = jnp.concatenate([sin_half, sin_half], axis=-1)
    cos_q = jnp.tile(cos_head, (1, NUM_HEADS))                     # (S, 128)
    sin_q = jnp.tile(sin_head, (1, NUM_HEADS))
    cos_kv = jnp.concatenate([jnp.tile(cos_head, (1, NUM_KV_HEADS)),
                              jnp.ones((SEQ, KV_SIZE), jnp.float32)], axis=-1)   # (S, 128)
    sin_kv = jnp.concatenate([jnp.tile(sin_head, (1, NUM_KV_HEADS)),
                              jnp.zeros((SEQ, KV_SIZE), jnp.float32)], axis=-1)  # (S, 128)

    # block-diagonal signed half-rotation permutation:  t @ rot == rotate_half(t) per head
    idx = jnp.arange(half)
    rot32 = jnp.zeros((HEAD_DIM, HEAD_DIM), jnp.float32)
    rot32 = rot32.at[half + idx, idx].set(-1.0)    # first half of output = -t2
    rot32 = rot32.at[idx, half + idx].set(1.0)     # second half of output = +t1
    rot = jnp.kron(jnp.eye(NUM_HEADS, dtype=jnp.float32), rot32).astype(jnp.bfloat16)  # (128,128)

    # ---- bf16 weight quantization (MXU-native); fused, lane-dense slabs ----
    w_qkv_b = w_qkv.astype(jnp.bfloat16)
    w_o_b = w_o.astype(jnp.bfloat16)
    w_gu_b = w_gu.astype(jnp.bfloat16)
    w_down_b = w_down.astype(jnp.bfloat16)

    wq_fused = w_qkv_b[:, :Q_SIZE]                 # (HIDDEN, 128) all Q heads
    wkv_fused = w_qkv_b[:, Q_SIZE:]                # (HIDDEN, 128) K|V packed

    x_flat = x.reshape(BATCH * SEQ, HIDDEN)
    out = granite_decoder_layer(x_flat, cos_q, sin_q, cos_kv, sin_kv, rot,
                                wq_fused, wkv_fused, w_o_b, w_gu_b, w_down_b,
                                rms1, rms2)
    out = jax.block_until_ready(out)

    # reference uses the same bf16-rounded weights (in f32) so the comparison
    # only measures kernel-side bf16 activation/score casts & approx reciprocal
    ref = jax.vmap(lambda xb: reference_layer(
        xb, cos_half, sin_half,
        w_qkv_b.astype(jnp.float32), w_o_b.astype(jnp.float32),
        w_gu_b.astype(jnp.float32), w_down_b.astype(jnp.float32),
        rms1, rms2))(x).reshape(BATCH * SEQ, HIDDEN)

    assert out.shape == (BATCH * SEQ, HIDDEN)
    assert jnp.allclose(out, ref, atol=3e-2, rtol=3e-2), "mismatch vs reference"

    print("KERNEL_OK")
</pallas_src>

<mosaic_0001>
module attributes {stable_mosaic.version = 11 : i64} {
  func.func @granite_decoder_layer_kernel(%arg0: i32, %arg1: memref<8x128xf32, #tpu.memory_space<vmem>>, %arg2: memref<8x128xf32, #tpu.memory_space<vmem>>, %arg3: memref<8x128xf32, #tpu.memory_space<vmem>>, %arg4: memref<8x128xf32, #tpu.memory_space<vmem>>, %arg5: memref<8x128xf32, #tpu.memory_space<vmem>>, %arg6: memref<128x128xbf16, #tpu.memory_space<vmem>>, %arg7: memref<128x128xbf16, #tpu.memory_space<vmem>>, %arg8: memref<128x128xbf16, #tpu.memory_space<vmem>>, %arg9: memref<128x128xbf16, #tpu.memory_space<vmem>>, %arg10: memref<128x512xbf16, #tpu.memory_space<vmem>>, %arg11: memref<256x128xbf16, #tpu.memory_space<vmem>>, %arg12: memref<1x128xf32, #tpu.memory_space<vmem>>, %arg13: memref<1x128xf32, #tpu.memory_space<vmem>>, %arg14: memref<8x128xf32, #tpu.memory_space<vmem>>) attributes {dimension_semantics = [#tpu.dimension_semantics<parallel>], iteration_bounds = array<i64: 2>, scalar_prefetch = 0 : i64, scratch_operands = 0 : i64, tpu.core_type = #tpu.core_type<tc>, window_params = [{transform_indices = @transform_0, window_bounds = array<i64: 8, 128>}, {pipeline_mode = #tpu.pipeline_mode<synchronous>, transform_indices = @transform_1, window_bounds = array<i64: 8, 128>}, {pipeline_mode = #tpu.pipeline_mode<synchronous>, transform_indices = @transform_2, window_bounds = array<i64: 8, 128>}, {pipeline_mode = #tpu.pipeline_mode<synchronous>, transform_indices = @transform_3, window_bounds = array<i64: 8, 128>}, {pipeline_mode = #tpu.pipeline_mode<synchronous>, transform_indices = @transform_4, window_bounds = array<i64: 8, 128>}, {pipeline_mode = #tpu.pipeline_mode<synchronous>, transform_indices = @transform_5, window_bounds = array<i64: 128, 128>}, {pipeline_mode = #tpu.pipeline_mode<synchronous>, transform_indices = @transform_6, window_bounds = array<i64: 128, 128>}, {pipeline_mode = #tpu.pipeline_mode<synchronous>, transform_indices = @transform_7, window_bounds = array<i64: 128, 128>}, {pipeline_mode = #tpu.pipeline_mode<synchronous>, transform_indices = @transform_8, window_bounds = array<i64: 128, 128>}, {pipeline_mode = #tpu.pipeline_mode<synchronous>, transform_indices = @transform_9, window_bounds = array<i64: 128, 512>}, {pipeline_mode = #tpu.pipeline_mode<synchronous>, transform_indices = @transform_10, window_bounds = array<i64: 256, 128>}, {pipeline_mode = #tpu.pipeline_mode<synchronous>, transform_indices = @transform_11, window_bounds = array<i64: 1, 128>}, {pipeline_mode = #tpu.pipeline_mode<synchronous>, transform_indices = @transform_12, window_bounds = array<i64: 1, 128>}, {transform_indices = @transform_13, window_bounds = array<i64: 8, 128>}]} {
    %c0 = arith.constant 0 : index
    %c0_0 = arith.constant 0 : index
    %0 = vector.load %arg1[%c0, %c0_0] : memref<8x128xf32, #tpu.memory_space<vmem>>, vector<8x128xf32>
    %c0_1 = arith.constant 0 : index
    %c0_2 = arith.constant 0 : index
    %1 = vector.load %arg6[%c0_1, %c0_2] : memref<128x128xbf16, #tpu.memory_space<vmem>>, vector<128x128xbf16>
    %c0_3 = arith.constant 0 : index
    %c0_4 = arith.constant 0 : index
    %2 = vector.load %arg12[%c0_3, %c0_4] : memref<1x128xf32, #tpu.memory_space<vmem>>, vector<1x128xf32>
    %3 = arith.mulf %0, %0 : vector<8x128xf32>
    %cst = arith.constant dense<0.000000e+00> : vector<8xf32>
    %4 = vector.multi_reduction <add>, %3, %cst [1] : vector<8x128xf32> to vector<8xf32>
    %5 = vector.shape_cast %4 : vector<8xf32> to vector<8x1xf32>
    %cst_5 = arith.constant 1.280000e+02 : f32
    %6 = vector.broadcast %cst_5 : f32 to vector<8x1xf32>
    %7 = arith.divf %5, %6 : vector<8x1xf32>
    %cst_6 = arith.constant 9.99999997E-7 : f32
    %8 = vector.broadcast %cst_6 : f32 to vector<8x1xf32>
    %9 = arith.addf %7, %8 : vector<8x1xf32>
    %10 = math.rsqrt %9 : vector<8x1xf32>
    %11 = vector.broadcast %10 : vector<8x1xf32> to vector<8x128xf32>
    %12 = arith.mulf %0, %11 : vector<8x128xf32>
    %13 = vector.broadcast %2 : vector<1x128xf32> to vector<8x128xf32>
    %14 = arith.mulf %12, %13 : vector<8x128xf32>
    %15 = arith.truncf %14 : vector<8x128xf32> to vector<8x128xbf16>
    %c0_7 = arith.constant 0 : index
    %c0_8 = arith.constant 0 : index
    %16 = vector.load %arg7[%c0_7, %c0_8] : memref<128x128xbf16, #tpu.memory_space<vmem>>, vector<128x128xbf16>
    %cst_9 = arith.constant dense<0.000000e+00> : vector<8x128xf32>
    %17 = tpu.matmul %15, %16, %cst_9 {dimension_numbers = #tpu.dot_dimension_numbers<[1], [0], [0], [1], [0, 0, 1, 1], [], []>} : vector<8x128xbf16>, vector<128x128xbf16>, vector<8x128xf32> -> vector<8x128xf32>
    %c0_10 = arith.constant 0 : index
    %c0_11 = arith.constant 0 : index
    %18 = vector.load %arg8[%c0_10, %c0_11] : memref<128x128xbf16, #tpu.memory_space<vmem>>, vector<128x128xbf16>
    %cst_12 = arith.constant dense<0.000000e+00> : vector<8x128xf32>
    %19 = tpu.matmul %15, %18, %cst_12 {dimension_numbers = #tpu.dot_dimension_numbers<[1], [0], [0], [1], [0, 0, 1, 1], [], []>} : vector<8x128xbf16>, vector<128x128xbf16>, vector<8x128xf32> -> vector<8x128xf32>
    %c0_13 = arith.constant 0 : index
    %c0_14 = arith.constant 0 : index
    %20 = vector.load %arg2[%c0_13, %c0_14] : memref<8x128xf32, #tpu.memory_space<vmem>>, vector<8x128xf32>
    %c0_15 = arith.constant 0 : index
    %c0_16 = arith.constant 0 : index
    %21 = vector.load %arg3[%c0_15, %c0_16] : memref<8x128xf32, #tpu.memory_space<vmem>>, vector<8x128xf32>
    %22 = arith.mulf %17, %20 : vector<8x128xf32>
    %23 = arith.truncf %17 : vector<8x128xf32> to vector<8x128xbf16>
    %cst_17 = arith.constant dense<0.000000e+00> : vector<8x128xf32>
    %24 = tpu.matmul %23, %1, %cst_17 {dimension_numbers = #tpu.dot_dimension_numbers<[1], [0], [0], [1], [0, 0, 1, 1], [], []>} : vector<8x128xbf16>, vector<128x128xbf16>, vector<8x128xf32> -> vector<8x128xf32>
    %25 = arith.mulf %24, %21 : vector<8x128xf32>
    %26 = arith.addf %22, %25 : vector<8x128xf32>
    %c0_18 = arith.constant 0 : index
    %c0_19 = arith.constant 0 : index
    %27 = vector.load %arg4[%c0_18, %c0_19] : memref<8x128xf32, #tpu.memory_space<vmem>>, vector<8x128xf32>
    %c0_20 = arith.constant 0 : index
    %c0_21 = arith.constant 0 : index
    %28 = vector.load %arg5[%c0_20, %c0_21] : memref<8x128xf32, #tpu.memory_space<vmem>>, vector<8x128xf32>
    %29 = arith.mulf %19, %27 : vector<8x128xf32>
    %30 = arith.truncf %19 : vector<8x128xf32> to vector<8x128xbf16>
    %cst_22 = arith.constant dense<0.000000e+00> : vector<8x128xf32>
    %31 = tpu.matmul %30, %1, %cst_22 {dimension_numbers = #tpu.dot_dimension_numbers<[1], [0], [0], [1], [0, 0, 1, 1], [], []>} : vector<8x128xbf16>, vector<128x128xbf16>, vector<8x128xf32> -> vector<8x128xf32>
    %32 = arith.mulf %31, %28 : vector<8x128xf32>
    %33 = arith.addf %29, %32 : vector<8x128xf32>
    %34 = arith.truncf %26 : vector<8x128xf32> to vector<8x128xbf16>
    %35 = arith.truncf %33 : vector<8x128xf32> to vector<8x128xbf16>
    %36 = tpu.iota {dimensions = array<i32: 0>} : vector<8x8xi32>
    %37 = tpu.iota {dimensions = array<i32: 1>} : vector<8x8xi32>
    %38 = arith.cmpi sle, %37, %36 : vector<8x8xi32>
    %39 = vector.extract_strided_slice %34 {offsets = [0, 0], sizes = [8, 32], strides = [1, 1]} : vector<8x128xbf16> to vector<8x32xbf16>
    %40 = vector.extract_strided_slice %35 {offsets = [0, 0], sizes = [8, 32], strides = [1, 1]} : vector<8x128xbf16> to vector<8x32xbf16>
    %41 = vector.extract_strided_slice %35 {offsets = [0, 64], sizes = [8, 32], strides = [1, 1]} : vector<8x128xbf16> to vector<8x32xbf16>
    %cst_23 = arith.constant dense<0.000000e+00> : vector<8x8xf32>
    %42 = tpu.matmul %39, %40, %cst_23 {dimension_numbers = #tpu.dot_dimension_numbers<[1], [1], [0], [0], [0, 0, 1, 0], [], []>} : vector<8x32xbf16>, vector<8x32xbf16>, vector<8x8xf32> -> vector<8x8xf32>
    %cst_24 = arith.constant 5.000000e-01 : f32
    %43 = vector.broadcast %cst_24 : f32 to vector<8x8xf32>
    %44 = arith.mulf %42, %43 : vector<8x8xf32>
    %cst_25 = arith.constant -1.000000e+30 : f32
    %45 = vector.broadcast %cst_25 : f32 to vector<8x8xf32>
    %46 = arith.select %38, %44, %45 : vector<8x8xi1>, vector<8x8xf32>
    %cst_26 = arith.constant dense<0xFF800000> : vector<8xf32>
    %47 = vector.multi_reduction <maximumf>, %46, %cst_26 [1] : vector<8x8xf32> to vector<8xf32>
    %48 = vector.shape_cast %47 : vector<8xf32> to vector<8x1xf32>
    %49 = vector.broadcast %48 : vector<8x1xf32> to vector<8x8xf32>
    %50 = arith.subf %46, %49 : vector<8x8xf32>
    %51 = math.exp %50 : vector<8x8xf32>
    %cst_27 = arith.constant dense<0.000000e+00> : vector<8xf32>
    %52 = vector.multi_reduction <add>, %51, %cst_27 [1] : vector<8x8xf32> to vector<8xf32>
    %53 = vector.shape_cast %52 : vector<8xf32> to vector<8x1xf32>
    %54 = tpu.reciprocal %53 {approx = true} : vector<8x1xf32> -> vector<8x1xf32>
    %55 = vector.broadcast %54 : vector<8x1xf32> to vector<8x8xf32>
    %56 = arith.mulf %51, %55 : vector<8x8xf32>
    %57 = arith.truncf %56 : vector<8x8xf32> to vector<8x8xbf16>
    %cst_28 = arith.constant dense<0.000000e+00> : vector<8x32xf32>
    %58 = tpu.matmul %57, %41, %cst_28 {dimension_numbers = #tpu.dot_dimension_numbers<[1], [0], [0], [1], [0, 0, 1, 1], [], []>} : vector<8x8xbf16>, vector<8x32xbf16>, vector<8x32xf32> -> vector<8x32xf32>
    %59 = vector.extract_strided_slice %34 {offsets = [0, 32], sizes = [8, 32], strides = [1, 1]} : vector<8x128xbf16> to vector<8x32xbf16>
    %60 = vector.extract_strided_slice %35 {offsets = [0, 0], sizes = [8, 32], strides = [1, 1]} : vector<8x128xbf16> to vector<8x32xbf16>
    %61 = vector.extract_strided_slice %35 {offsets = [0, 64], sizes = [8, 32], strides = [1, 1]} : vector<8x128xbf16> to vector<8x32xbf16>
    %cst_29 = arith.constant dense<0.000000e+00> : vector<8x8xf32>
    %62 = tpu.matmul %59, %60, %cst_29 {dimension_numbers = #tpu.dot_dimension_numbers<[1], [1], [0], [0], [0, 0, 1, 0], [], []>} : vector<8x32xbf16>, vector<8x32xbf16>, vector<8x8xf32> -> vector<8x8xf32>
    %cst_30 = arith.constant 5.000000e-01 : f32
    %63 = vector.broadcast %cst_30 : f32 to vector<8x8xf32>
    %64 = arith.mulf %62, %63 : vector<8x8xf32>
    %cst_31 = arith.constant -1.000000e+30 : f32
    %65 = vector.broadcast %cst_31 : f32 to vector<8x8xf32>
    %66 = arith.select %38, %64, %65 : vector<8x8xi1>, vector<8x8xf32>
    %cst_32 = arith.constant dense<0xFF800000> : vector<8xf32>
    %67 = vector.multi_reduction <maximumf>, %66, %cst_32 [1] : vector<8x8xf32> to vector<8xf32>
    %68 = vector.shape_cast %67 : vector<8xf32> to vector<8x1xf32>
    %69 = vector.broadcast %68 : vector<8x1xf32> to vector<8x8xf32>
    %70 = arith.subf %66, %69 : vector<8x8xf32>
    %71 = math.exp %70 : vector<8x8xf32>
    %cst_33 = arith.constant dense<0.000000e+00> : vector<8xf32>
    %72 = vector.multi_reduction <add>, %71, %cst_33 [1] : vector<8x8xf32> to vector<8xf32>
    %73 = vector.shape_cast %72 : vector<8xf32> to vector<8x1xf32>
    %74 = tpu.reciprocal %73 {approx = true} : vector<8x1xf32> -> vector<8x1xf32>
    %75 = vector.broadcast %74 : vector<8x1xf32> to vector<8x8xf32>
    %76 = arith.mulf %71, %75 : vector<8x8xf32>
    %77 = arith.truncf %76 : vector<8x8xf32> to vector<8x8xbf16>
    %cst_34 = arith.constant dense<0.000000e+00> : vector<8x32xf32>
    %78 = tpu.matmul %77, %61, %cst_34 {dimension_numbers = #tpu.dot_dimension_numbers<[1], [0], [0], [1], [0, 0, 1, 1], [], []>} : vector<8x8xbf16>, vector<8x32xbf16>, vector<8x32xf32> -> vector<8x32xf32>
    %79 = vector.extract_strided_slice %34 {offsets = [0, 64], sizes = [8, 32], strides = [1, 1]} : vector<8x128xbf16> to vector<8x32xbf16>
    %80 = vector.extract_strided_slice %35 {offsets = [0, 32], sizes = [8, 32], strides = [1, 1]} : vector<8x128xbf16> to vector<8x32xbf16>
    %81 = vector.extract_strided_slice %35 {offsets = [0, 96], sizes = [8, 32], strides = [1, 1]} : vector<8x128xbf16> to vector<8x32xbf16>
    %cst_35 = arith.constant dense<0.000000e+00> : vector<8x8xf32>
    %82 = tpu.matmul %79, %80, %cst_35 {dimension_numbers = #tpu.dot_dimension_numbers<[1], [1], [0], [0], [0, 0, 1, 0], [], []>} : vector<8x32xbf16>, vector<8x32xbf16>, vector<8x8xf32> -> vector<8x8xf32>
    %cst_36 = arith.constant 5.000000e-01 : f32
    %83 = vector.broadcast %cst_36 : f32 to vector<8x8xf32>
    %84 = arith.mulf %82, %83 : vector<8x8xf32>
    %cst_37 = arith.constant -1.000000e+30 : f32
    %85 = vector.broadcast %cst_37 : f32 to vector<8x8xf32>
    %86 = arith.select %38, %84, %85 : vector<8x8xi1>, vector<8x8xf32>
    %cst_38 = arith.constant dense<0xFF800000> : vector<8xf32>
    %87 = vector.multi_reduction <maximumf>, %86, %cst_38 [1] : vector<8x8xf32> to vector<8xf32>
    %88 = vector.shape_cast %87 : vector<8xf32> to vector<8x1xf32>
    %89 = vector.broadcast %88 : vector<8x1xf32> to vector<8x8xf32>
    %90 = arith.subf %86, %89 : vector<8x8xf32>
    %91 = math.exp %90 : vector<8x8xf32>
    %cst_39 = arith.constant dense<0.000000e+00> : vector<8xf32>
    %92 = vector.multi_reduction <add>, %91, %cst_39 [1] : vector<8x8xf32> to vector<8xf32>
    %93 = vector.shape_cast %92 : vector<8xf32> to vector<8x1xf32>
    %94 = tpu.reciprocal %93 {approx = true} : vector<8x1xf32> -> vector<8x1xf32>
    %95 = vector.broadcast %94 : vector<8x1xf32> to vector<8x8xf32>
    %96 = arith.mulf %91, %95 : vector<8x8xf32>
    %97 = arith.truncf %96 : vector<8x8xf32> to vector<8x8xbf16>
    %cst_40 = arith.constant dense<0.000000e+00> : vector<8x32xf32>
    %98 = tpu.matmul %97, %81, %cst_40 {dimension_numbers = #tpu.dot_dimension_numbers<[1], [0], [0], [1], [0, 0, 1, 1], [], []>} : vector<8x8xbf16>, vector<8x32xbf16>, vector<8x32xf32> -> vector<8x32xf32>
    %99 = vector.extract_strided_slice %34 {offsets = [0, 96], sizes = [8, 32], strides = [1, 1]} : vector<8x128xbf16> to vector<8x32xbf16>
    %100 = vector.extract_strided_slice %35 {offsets = [0, 32], sizes = [8, 32], strides = [1, 1]} : vector<8x128xbf16> to vector<8x32xbf16>
    %101 = vector.extract_strided_slice %35 {offsets = [0, 96], sizes = [8, 32], strides = [1, 1]} : vector<8x128xbf16> to vector<8x32xbf16>
    %cst_41 = arith.constant dense<0.000000e+00> : vector<8x8xf32>
    %102 = tpu.matmul %99, %100, %cst_41 {dimension_numbers = #tpu.dot_dimension_numbers<[1], [1], [0], [0], [0, 0, 1, 0], [], []>} : vector<8x32xbf16>, vector<8x32xbf16>, vector<8x8xf32> -> vector<8x8xf32>
    %cst_42 = arith.constant 5.000000e-01 : f32
    %103 = vector.broadcast %cst_42 : f32 to vector<8x8xf32>
    %104 = arith.mulf %102, %103 : vector<8x8xf32>
    %cst_43 = arith.constant -1.000000e+30 : f32
    %105 = vector.broadcast %cst_43 : f32 to vector<8x8xf32>
    %106 = arith.select %38, %104, %105 : vector<8x8xi1>, vector<8x8xf32>
    %cst_44 = arith.constant dense<0xFF800000> : vector<8xf32>
    %107 = vector.multi_reduction <maximumf>, %106, %cst_44 [1] : vector<8x8xf32> to vector<8xf32>
    %108 = vector.shape_cast %107 : vector<8xf32> to vector<8x1xf32>
    %109 = vector.broadcast %108 : vector<8x1xf32> to vector<8x8xf32>
    %110 = arith.subf %106, %109 : vector<8x8xf32>
    %111 = math.exp %110 : vector<8x8xf32>
    %cst_45 = arith.constant dense<0.000000e+00> : vector<8xf32>
    %112 = vector.multi_reduction <add>, %111, %cst_45 [1] : vector<8x8xf32> to vector<8xf32>
    %113 = vector.shape_cast %112 : vector<8xf32> to vector<8x1xf32>
    %114 = tpu.reciprocal %113 {approx = true} : vector<8x1xf32> -> vector<8x1xf32>
    %115 = vector.broadcast %114 : vector<8x1xf32> to vector<8x8xf32>
    %116 = arith.mulf %111, %115 : vector<8x8xf32>
    %117 = arith.truncf %116 : vector<8x8xf32> to vector<8x8xbf16>
    %cst_46 = arith.constant dense<0.000000e+00> : vector<8x32xf32>
    %118 = tpu.matmul %117, %101, %cst_46 {dimension_numbers = #tpu.dot_dimension_numbers<[1], [0], [0], [1], [0, 0, 1, 1], [], []>} : vector<8x8xbf16>, vector<8x32xbf16>, vector<8x32xf32> -> vector<8x32xf32>
    %119 = tpu.concatenate %58, %78, %98, %118 in 1 : vector<8x32xf32>, vector<8x32xf32>, vector<8x32xf32>, vector<8x32xf32> -> vector<8x128xf32>
    %120 = arith.truncf %119 : vector<8x128xf32> to vector<8x128xbf16>
    %c0_47 = arith.constant 0 : index
    %c0_48 = arith.constant 0 : index
    %121 = vector.load %arg9[%c0_47, %c0_48] : memref<128x128xbf16, #tpu.memory_space<vmem>>, vector<128x128xbf16>
    %cst_49 = arith.constant dense<0.000000e+00> : vector<8x128xf32>
    %122 = tpu.matmul %120, %121, %cst_49 {dimension_numbers = #tpu.dot_dimension_numbers<[1], [0], [0], [1], [0, 0, 1, 1], [], []>} : vector<8x128xbf16>, vector<128x128xbf16>, vector<8x128xf32> -> vector<8x128xf32>
    %cst_50 = arith.constant 0.699999988 : f32
    %123 = vector.broadcast %cst_50 : f32 to vector<8x128xf32>
    %124 = arith.mulf %122, %123 : vector<8x128xf32>
    %125 = arith.addf %0, %124 : vector<8x128xf32>
    %c0_51 = arith.constant 0 : index
    %c0_52 = arith.constant 0 : index
    %126 = vector.load %arg13[%c0_51, %c0_52] : memref<1x128xf32, #tpu.memory_space<vmem>>, vector<1x128xf32>
    %127 = arith.mulf %125, %125 : vector<8x128xf32>
    %cst_53 = arith.constant dense<0.000000e+00> : vector<8xf32>
    %128 = vector.multi_reduction <add>, %127, %cst_53 [1] : vector<8x128xf32> to vector<8xf32>
    %129 = vector.shape_cast %128 : vector<8xf32> to vector<8x1xf32>
    %cst_54 = arith.constant 1.280000e+02 : f32
    %130 = vector.broadcast %cst_54 : f32 to vector<8x1xf32>
    %131 = arith.divf %129, %130 : vector<8x1xf32>
    %cst_55 = arith.constant 9.99999997E-7 : f32
    %132 = vector.broadcast %cst_55 : f32 to vector<8x1xf32>
    %133 = arith.addf %131, %132 : vector<8x1xf32>
    %134 = math.rsqrt %133 : vector<8x1xf32>
    %135 = vector.broadcast %134 : vector<8x1xf32> to vector<8x128xf32>
    %136 = arith.mulf %125, %135 : vector<8x128xf32>
    %137 = vector.broadcast %126 : vector<1x128xf32> to vector<8x128xf32>
    %138 = arith.mulf %136, %137 : vector<8x128xf32>
    %139 = arith.truncf %138 : vector<8x128xf32> to vector<8x128xbf16>
    %c0_56 = arith.constant 0 : index
    %c0_57 = arith.constant 0 : index
    %140 = vector.load %arg10[%c0_56, %c0_57] : memref<128x512xbf16, #tpu.memory_space<vmem>>, vector<128x512xbf16>
    %cst_58 = arith.constant dense<0.000000e+00> : vector<8x512xf32>
    %141 = tpu.matmul %139, %140, %cst_58 {dimension_numbers = #tpu.dot_dimension_numbers<[1], [0], [0], [1], [0, 0, 1, 1], [], []>} : vector<8x128xbf16>, vector<128x512xbf16>, vector<8x512xf32> -> vector<8x512xf32>
    %142 = vector.extract_strided_slice %141 {offsets = [0, 0], sizes = [8, 256], strides = [1, 1]} : vector<8x512xf32> to vector<8x256xf32>
    %143 = vector.extract_strided_slice %141 {offsets = [0, 256], sizes = [8, 256], strides = [1, 1]} : vector<8x512xf32> to vector<8x256xf32>
    %144 = arith.negf %142 : vector<8x256xf32>
    %145 = math.exp %144 : vector<8x256xf32>
    %cst_59 = arith.constant 1.000000e+00 : f32
    %146 = vector.broadcast %cst_59 : f32 to vector<8x256xf32>
    %147 = arith.addf %146, %145 : vector<8x256xf32>
    %148 = arith.divf %146, %147 : vector<8x256xf32>
    %149 = arith.mulf %142, %148 : vector<8x256xf32>
    %150 = arith.mulf %149, %143 : vector<8x256xf32>
    %151 = arith.truncf %150 : vector<8x256xf32> to vector<8x256xbf16>
    %c0_60 = arith.constant 0 : index
    %c0_61 = arith.constant 0 : index
    %152 = vector.load %arg11[%c0_60, %c0_61] : memref<256x128xbf16, #tpu.memory_space<vmem>>, vector<256x128xbf16>
    %cst_62 = arith.constant dense<0.000000e+00> : vector<8x128xf32>
    %153 = tpu.matmul %151, %152, %cst_62 {dimension_numbers = #tpu.dot_dimension_numbers<[1], [0], [0], [1], [0, 0, 1, 1], [], []>} : vector<8x256xbf16>, vector<256x128xbf16>, vector<8x128xf32> -> vector<8x128xf32>
    %cst_63 = arith.constant 0.699999988 : f32
    %154 = vector.broadcast %cst_63 : f32 to vector<8x128xf32>
    %155 = arith.mulf %153, %154 : vector<8x128xf32>
    %156 = arith.addf %125, %155 : vector<8x128xf32>
    %c0_64 = arith.constant 0 : index
    %c0_65 = arith.constant 0 : index
    %157 = vector.load %arg14[%c0_64, %c0_65] : memref<8x128xf32, #tpu.memory_space<vmem>>, vector<8x128xf32>
    tpu.vector_store %arg14[%c0_64, %c0_65], %156 {strides = array<i32>} : memref<8x128xf32, #tpu.memory_space<vmem>>, vector<8x128xf32>,
    return
  }
  func.func @transform_0(%arg0: i32) -> (i32, i32) {
    %c0_i32 = arith.constant 0 : i32
    %c0_i32_0 = arith.constant 0 : i32
    return %arg0, %c0_i32 : i32, i32
  }
  func.func @transform_1(%arg0: i32) -> (i32, i32) {
    %c0_i32 = arith.constant 0 : i32
    %c0_i32_0 = arith.constant 0 : i32
    %c0_i32_1 = arith.constant 0 : i32
    return %c0_i32, %c0_i32_0 : i32, i32
  }
  func.func @transform_2(%arg0: i32) -> (i32, i32) {
    %c0_i32 = arith.constant 0 : i32
    %c0_i32_0 = arith.constant 0 : i32
    %c0_i32_1 = arith.constant 0 : i32
    return %c0_i32, %c0_i32_0 : i32, i32
  }
  func.func @transform_3(%arg0: i32) -> (i32, i32) {
    %c0_i32 = arith.constant 0 : i32
    %c0_i32_0 = arith.constant 0 : i32
    %c0_i32_1 = arith.constant 0 : i32
    return %c0_i32, %c0_i32_0 : i32, i32
  }
  func.func @transform_4(%arg0: i32) -> (i32, i32) {
    %c0_i32 = arith.constant 0 : i32
    %c0_i32_0 = arith.constant 0 : i32
    %c0_i32_1 = arith.constant 0 : i32
    return %c0_i32, %c0_i32_0 : i32, i32
  }
  func.func @transform_5(%arg0: i32) -> (i32, i32) {
    %c0_i32 = arith.constant 0 : i32
    %c0_i32_0 = arith.constant 0 : i32
    %c0_i32_1 = arith.constant 0 : i32
    return %c0_i32, %c0_i32_0 : i32, i32
  }
  func.func @transform_6(%arg0: i32) -> (i32, i32) {
    %c0_i32 = arith.constant 0 : i32
    %c0_i32_0 = arith.constant 0 : i32
    %c0_i32_1 = arith.constant 0 : i32
    return %c0_i32, %c0_i32_0 : i32, i32
  }
  func.func @transform_7(%arg0: i32) -> (i32, i32) {
    %c0_i32 = arith.constant 0 : i32
    %c0_i32_0 = arith.constant 0 : i32
    %c0_i32_1 = arith.constant 0 : i32
    return %c0_i32, %c0_i32_0 : i32, i32
  }
  func.func @transform_8(%arg0: i32) -> (i32, i32) {
    %c0_i32 = arith.constant 0 : i32
    %c0_i32_0 = arith.constant 0 : i32
    %c0_i32_1 = arith.constant 0 : i32
    return %c0_i32, %c0_i32_0 : i32, i32
  }
  func.func @transform_9(%arg0: i32) -> (i32, i32) {
    %c0_i32 = arith.constant 0 : i32
    %c0_i32_0 = arith.constant 0 : i32
    %c0_i32_1 = arith.constant 0 : i32
    return %c0_i32, %c0_i32_0 : i32, i32
  }
  func.func @transform_10(%arg0: i32) -> (i32, i32) {
    %c0_i32 = arith.constant 0 : i32
    %c0_i32_0 = arith.constant 0 : i32
    %c0_i32_1 = arith.constant 0 : i32
    return %c0_i32, %c0_i32_0 : i32, i32
  }
  func.func @transform_11(%arg0: i32) -> (i32, i32) {
    %c0_i32 = arith.constant 0 : i32
    %c0_i32_0 = arith.constant 0 : i32
    %c0_i32_1 = arith.constant 0 : i32
    return %c0_i32, %c0_i32_0 : i32, i32
  }
  func.func @transform_12(%arg0: i32) -> (i32, i32) {
    %c0_i32 = arith.constant 0 : i32
    %c0_i32_0 = arith.constant 0 : i32
    %c0_i32_1 = arith.constant 0 : i32
    return %c0_i32, %c0_i32_0 : i32, i32
  }
  func.func @transform_13(%arg0: i32) -> (i32, i32) {
    %c0_i32 = arith.constant 0 : i32
    %c0_i32_0 = arith.constant 0 : i32
    return %arg0, %c0_i32 : i32, i32
  }
}

</mosaic_0001>

<llo_original>
// kernel: tpu_custom_call.1
$region0: #{tpu_custom_call.1}
  #allocation0 [shape = 'u32[]', space=smem, size = 0x4, offset = 0x4, fixed_abs, tag = 'smem constant byte address 0x4 - core index']
  #allocation1 [shape = 'u32[144,128]{1,0:T(1,128)}', space=vmem, size = 0x12000, scoped, tag = 'internal scratch']
  %s0 = inlined_call_operand.hbm [shape: f32[16,128], index: 0, kind: input, shape index: {}]
  %s1 = inlined_call_operand.hbm [shape: f32[8,128], index: 1, kind: input, shape index: {}]
  %s2 = inlined_call_operand.hbm [shape: f32[8,128], index: 2, kind: input, shape index: {}]
  %s3 = inlined_call_operand.vmem [shape: f32[8,128], index: 3, kind: input, shape index: {}]
  %s4 = inlined_call_operand.hbm [shape: f32[8,128], index: 4, kind: input, shape index: {}]
  %s5 = inlined_call_operand.hbm [shape: bf16[128,128], index: 5, kind: input, shape index: {}]
  %s6 = inlined_call_operand.hbm [shape: bf16[128,128], index: 6, kind: input, shape index: {}]
  %s7 = inlined_call_operand.hbm [shape: bf16[128,128], index: 7, kind: input, shape index: {}]
  %s8 = inlined_call_operand.hbm [shape: bf16[128,128], index: 8, kind: input, shape index: {}]
  %s9 = inlined_call_operand.hbm [shape: bf16[128,512], index: 9, kind: input, shape index: {}]
  %s10 = inlined_call_operand.hbm [shape: bf16[256,128], index: 10, kind: input, shape index: {}]
  %s11 = inlined_call_operand.vmem [shape: f32[1,128], index: 11, kind: input, shape index: {}]
  %s12 = inlined_call_operand.vmem [shape: f32[1,128], index: 12, kind: input, shape index: {}]
  %s13 = inlined_call_operand.hbm [shape: f32[16,128], index: 13, kind: output, shape index: {}]
  %s14 = sld [smem:[#allocation0]]
  $region125: #{tpu_custom_call.1} parent=0
    _
  %s16 = ssub.s32 1, %s14
  %s17 = scalar_select 0, %s16, %s14
  $region1: #{tpu_custom_call.1} parent=0
    #allocation2 [shape = 'u8[8192]{0}', space=vmem, size = 0x2000, scoped, tag = 'input window, operand 0']
    #allocation3 [shape = 's32[2]{0}', space=sflag, size = 0x8, scoped, tag = 'scoped memory for tpu_custom_call.1']
    #allocation4 [shape = 's32[2]{0}', space=sflag, size = 0x8, scoped, tag = 'scoped memory for tpu_custom_call.1']
    #allocation5 [shape = 'u8[4096]{0}', space=vmem, size = 0x1000, scoped, tag = 'input window, operand 1, single buffered']
    #allocation6 [shape = 's32[1]{0}', space=sflag, size = 0x4, scoped, tag = 'scoped memory for tpu_custom_call.1']
    #allocation7 [shape = 'u8[4096]{0}', space=vmem, size = 0x1000, scoped, tag = 'input window, operand 2, single buffered']
    #allocation8 [shape = 'u8[4096]{0}', space=vmem, size = 0x1000, scoped, tag = 'input window, operand 4, single buffered']
    #allocation9 [shape = 's32[1]{0}', space=sflag, size = 0x4, scoped, tag = 'scoped memory for tpu_custom_call.1']
    #allocation10 [shape = 'u8[32768]{0}', space=vmem, size = 0x8000, scoped, tag = 'input window, operand 5, single buffered']
    #allocation11 [shape = 'u8[32768]{0}', space=vmem, size = 0x8000, scoped, tag = 'input window, operand 6, single buffered']
    #allocation12 [shape = 's32[1]{0}', space=sflag, size = 0x4, scoped, tag = 'scoped memory for tpu_custom_call.1']
    #allocation13 [shape = 'u8[32768]{0}', space=vmem, size = 0x8000, scoped, tag = 'input window, operand 7, single buffered']
    #allocation14 [shape = 'u8[32768]{0}', space=vmem, size = 0x8000, scoped, tag = 'input window, operand 8, single buffered']
    #allocation15 [shape = 's32[1]{0}', space=sflag, size = 0x4, scoped, tag = 'scoped memory for tpu_custom_call.1']
    #allocation16 [shape = 'u8[131072]{0}', space=vmem, size = 0x20000, scoped, tag = 'input window, operand 9, single buffered']
    #allocation17 [shape = 'u8[65536]{0}', space=vmem, size = 0x10000, scoped, tag = 'input window, operand 10, single buffered']
    #allocation18 [shape = 's32[1]{0}', space=sflag, size = 0x4, scoped, tag = 'scoped memory for tpu_custom_call.1']
    #allocation19 [shape = 'u8[8192]{0}', space=vmem, size = 0x2000, scoped, tag = 'output window, operand 0']
    %18 = vsyncpa [#allocation3], 0
    %s19 = scalar_lea.sflag [#allocation3], 1
    %20 = vsyncpa %s19, 0
    %21 = vsyncpa [#allocation6], 0
    %22 = vsyncpa [#allocation9], 0
    %23 = vsyncpa [#allocation12], 0
    %24 = vsyncpa [#allocation15], 0
    %25 = vsyncpa [#allocation18], 0
    %26 = vsyncpa [#allocation4], 0
    %s27 = scalar_lea.sflag [#allocation4], 1
    %28 = vsyncpa %s27, 0
    loop: start=0, step=1, limit=4
    $region2: #{tpu_custom_call.1} parent=1 // loop_pre_header
      _
    $region3: #{tpu_custom_call.1} parent=1 // loop_header
      %s30 = sphi 0, %s34
      %p31 = scmp.ge.s32.totalorder %s30, 4
      %s40 = sphi 0, %s42
      %s43 = sphi 0, %s40
      %s44 = sphi 0, %s43
      %s60 = sphi 0, %s44
      %s64 = sphi 0, %s64
      %s66 = sphi 0, %s64
      %s67 = sphi 0, %s66
      %s81 = sphi 0, %s67
      %s85 = sphi 0, %s85
      %s87 = sphi 0, %s85
      %s88 = sphi 0, %s87
      %s102 = sphi 0, %s88
      %s106 = sphi 0, %s106
      %s108 = sphi 0, %s106
      %s109 = sphi 0, %s108
      %s123 = sphi 0, %s109
      %s127 = sphi 0, %s127
      %s129 = sphi 0, %s127
      %s130 = sphi 0, %s129
      %s144 = sphi 0, %s130
      %s148 = sphi 0, %s148
      %s150 = sphi 0, %s148
      %s151 = sphi 0, %s150
      %s165 = sphi 0, %s151
      %s169 = sphi 0, %s169
      %s171 = sphi 0, %s169
      %s172 = sphi 0, %s171
      %s186 = sphi 0, %s172
      %s190 = sphi 0, %s190
      %s192 = sphi 0, %s190
      %s193 = sphi 0, %s192
      %s207 = sphi 0, %s193
      %s211 = sphi 0, %s211
      %s213 = sphi 0, %s211
      %s214 = sphi 0, %s213
      %s228 = sphi 0, %s214
      %s232 = sphi 0, %s232
      %s234 = sphi 0, %s232
      %s235 = sphi 0, %s234
      %s249 = sphi 0, %s235
      %s253 = sphi 0, %s253
      %s255 = sphi 0, %s253
      %s256 = sphi 0, %s255
      %s270 = sphi 0, %s256
      %s274 = sphi 0, %s274
      %s276 = sphi 0, %s274
      %s277 = sphi 0, %s276
      %s291 = sphi 0, %s277
      %s295 = sphi 0, %s295
      %s297 = sphi 0, %s295
      %s298 = sphi 0, %s297
      %s312 = sphi 0, %s298
      %s318 = sphi 0, %s320
      %s321 = sphi 0, %s318
      %s322 = sphi 0, %s321
      %s338 = sphi 0, %s322
    $region4: #{tpu_custom_call.1} parent=1 // loop_header_branch
      %33 = sbr.rel (%p31) target = $region8
    $region5: #{tpu_custom_call.1} parent=1 // loop_body
      %s35 = ssub.s32 %s30, 1
      %s36 = ssub.s32 %s30, 2
      %s37 = sadd.s32 %s30, 1
      %s38 = ssub.s32 %s30, %s37
      %p39 = scmp.eq.s32.totalorder %s38, 0
      %s41 = sadd.s32 %s40, 1
      %s42 = scalar_select %p39, %s40, %s41
      %p45 = pneg %p39
      %p46 = scmp.eq.s32.totalorder %s30, 1
      %p47 = por %p45, %p46
      %p48 = scmp.ne.s32.totalorder %s40, %s43
      %p49 = scmp.eq.s32.totalorder %s30, 0
      %p50 = por %p48, %p49
      %p51 = scmp.ne.s32.totalorder %s40, %s43
      %p52 = scmp.eq.s32.totalorder %s35, 1
      %p53 = por %p51, %p52
      %p54 = scmp.ne.s32.totalorder %s43, %s44
      %p55 = scmp.eq.s32.totalorder %s35, 0
      %p56 = por %p54, %p55
      %p57 = scmp.ne.s32.totalorder %s43, %s44
      %p58 = scmp.eq.s32.totalorder %s36, 1
      %p59 = por %p57, %p58
      %p61 = scmp.ne.s32.totalorder %s44, %s60
      %p62 = scmp.eq.s32.totalorder %s36, 0
      %p63 = por %p61, %p62
      %s65 = sadd.s32 %s64, 1
      %p68 = scmp.eq.s32.totalorder %s30, 1
      %p69 = scmp.ne.s32.totalorder %s64, %s66
      %p70 = scmp.eq.s32.totalorder %s30, 0
      %p71 = por %p69, %p70
      %p72 = scmp.ne.s32.totalorder %s64, %s66
      %p73 = scmp.eq.s32.totalorder %s35, 1
      %p74 = por %p72, %p73
      %p75 = scmp.ne.s32.totalorder %s66, %s67
      %p76 = scmp.eq.s32.totalorder %s35, 0
      %p77 = por %p75, %p76
      %p78 = scmp.ne.s32.totalorder %s66, %s67
      %p79 = scmp.eq.s32.totalorder %s36, 1
      %p80 = por %p78, %p79
      %p82 = scmp.ne.s32.totalorder %s67, %s81
      %p83 = scmp.eq.s32.totalorder %s36, 0
      %p84 = por %p82, %p83
      %s86 = sadd.s32 %s85, 1
      %p89 = scmp.eq.s32.totalorder %s30, 1
      %p90 = scmp.ne.s32.totalorder %s85, %s87
      %p91 = scmp.eq.s32.totalorder %s30, 0
      %p92 = por %p90, %p91
      %p93 = scmp.ne.s32.totalorder %s85, %s87
      %p94 = scmp.eq.s32.totalorder %s35, 1
      %p95 = por %p93, %p94
      %p96 = scmp.ne.s32.totalorder %s87, %s88
      %p97 = scmp.eq.s32.totalorder %s35, 0
      %p98 = por %p96, %p97
      %p99 = scmp.ne.s32.totalorder %s87, %s88
      %p100 = scmp.eq.s32.totalorder %s36, 1
      %p101 = por %p99, %p100
      %p103 = scmp.ne.s32.totalorder %s88, %s102
      %p104 = scmp.eq.s32.totalorder %s36, 0
      %p105 = por %p103, %p104
      %s107 = sadd.s32 %s106, 1
      %p110 = scmp.eq.s32.totalorder %s30, 1
      %p111 = scmp.ne.s32.totalorder %s106, %s108
      %p112 = scmp.eq.s32.totalorder %s30, 0
      %p113 = por %p111, %p112
      %p114 = scmp.ne.s32.totalorder %s106, %s108
      %p115 = scmp.eq.s32.totalorder %s35, 1
      %p116 = por %p114, %p115
      %p117 = scmp.ne.s32.totalorder %s108, %s109
      %p118 = scmp.eq.s32.totalorder %s35, 0
      %p119 = por %p117, %p118
      %p120 = scmp.ne.s32.totalorder %s108, %s109
      %p121 = scmp.eq.s32.totalorder %s36, 1
      %p122 = por %p120, %p121
      %p124 = scmp.ne.s32.totalorder %s109, %s123
      %p125 = scmp.eq.s32.totalorder %s36, 0
      %p126 = por %p124, %p125
      %s128 = sadd.s32 %s127, 1
      %p131 = scmp.eq.s32.totalorder %s30, 1
      %p132 = scmp.ne.s32.totalorder %s127, %s129
      %p133 = scmp.eq.s32.totalorder %s30, 0
      %p134 = por %p132, %p133
      %p135 = scmp.ne.s32.totalorder %s127, %s129
      %p136 = scmp.eq.s32.totalorder %s35, 1
      %p137 = por %p135, %p136
      %p138 = scmp.ne.s32.totalorder %s129, %s130
      %p139 = scmp.eq.s32.totalorder %s35, 0
      %p140 = por %p138, %p139
      %p141 = scmp.ne.s32.totalorder %s129, %s130
      %p142 = scmp.eq.s32.totalorder %s36, 1
      %p143 = por %p141, %p142
      %p145 = scmp.ne.s32.totalorder %s130, %s144
      %p146 = scmp.eq.s32.totalorder %s36, 0
      %p147 = por %p145, %p146
      %s149 = sadd.s32 %s148, 1
      %p152 = scmp.eq.s32.totalorder %s30, 1
      %p153 = scmp.ne.s32.totalorder %s148, %s150
      %p154 = scmp.eq.s32.totalorder %s30, 0
      %p155 = por %p153, %p154
      %p156 = scmp.ne.s32.totalorder %s148, %s150
      %p157 = scmp.eq.s32.totalorder %s35, 1
      %p158 = por %p156, %p157
      %p159 = scmp.ne.s32.totalorder %s150, %s151
      %p160 = scmp.eq.s32.totalorder %s35, 0
      %p161 = por %p159, %p160
      %p162 = scmp.ne.s32.totalorder %s150, %s151
      %p163 = scmp.eq.s32.totalorder %s36, 1
      %p164 = por %p162, %p163
      %p166 = scmp.ne.s32.totalorder %s151, %s165
      %p167 = scmp.eq.s32.totalorder %s36, 0
      %p168 = por %p166, %p167
      %s170 = sadd.s32 %s169, 1
      %p173 = scmp.eq.s32.totalorder %s30, 1
      %p174 = scmp.ne.s32.totalorder %s169, %s171
      %p175 = scmp.eq.s32.totalorder %s30, 0
      %p176 = por %p174, %p175
      %p177 = scmp.ne.s32.totalorder %s169, %s171
      %p178 = scmp.eq.s32.totalorder %s35, 1
      %p179 = por %p177, %p178
      %p180 = scmp.ne.s32.totalorder %s171, %s172
      %p181 = scmp.eq.s32.totalorder %s35, 0
      %p182 = por %p180, %p181
      %p183 = scmp.ne.s32.totalorder %s171, %s172
      %p184 = scmp.eq.s32.totalorder %s36, 1
      %p185 = por %p183, %p184
      %p187 = scmp.ne.s32.totalorder %s172, %s186
      %p188 = scmp.eq.s32.totalorder %s36, 0
      %p189 = por %p187, %p188
      %s191 = sadd.s32 %s190, 1
      %p194 = scmp.eq.s32.totalorder %s30, 1
      %p195 = scmp.ne.s32.totalorder %s190, %s192
      %p196 = scmp.eq.s32.totalorder %s30, 0
      %p197 = por %p195, %p196
      %p198 = scmp.ne.s32.totalorder %s190, %s192
      %p199 = scmp.eq.s32.totalorder %s35, 1
      %p200 = por %p198, %p199
      %p201 = scmp.ne.s32.totalorder %s192, %s193
      %p202 = scmp.eq.s32.totalorder %s35, 0
      %p203 = por %p201, %p202
      %p204 = scmp.ne.s32.totalorder %s192, %s193
      %p205 = scmp.eq.s32.totalorder %s36, 1
      %p206 = por %p204, %p205
      %p208 = scmp.ne.s32.totalorder %s193, %s207
      %p209 = scmp.eq.s32.totalorder %s36, 0
      %p210 = por %p208, %p209
      %s212 = sadd.s32 %s211, 1
      %p215 = scmp.eq.s32.totalorder %s30, 1
      %p216 = scmp.ne.s32.totalorder %s211, %s213
      %p217 = scmp.eq.s32.totalorder %s30, 0
      %p218 = por %p216, %p217
      %p219 = scmp.ne.s32.totalorder %s211, %s213
      %p220 = scmp.eq.s32.totalorder %s35, 1
      %p221 = por %p219, %p220
      %p222 = scmp.ne.s32.totalorder %s213, %s214
      %p223 = scmp.eq.s32.totalorder %s35, 0
      %p224 = por %p222, %p223
      %p225 = scmp.ne.s32.totalorder %s213, %s214
      %p226 = scmp.eq.s32.totalorder %s36, 1
      %p227 = por %p225, %p226
      %p229 = scmp.ne.s32.totalorder %s214, %s228
      %p230 = scmp.eq.s32.totalorder %s36, 0
      %p231 = por %p229, %p230
      %s233 = sadd.s32 %s232, 1
      %p236 = scmp.eq.s32.totalorder %s30, 1
      %p237 = scmp.ne.s32.totalorder %s232, %s234
      %p238 = scmp.eq.s32.totalorder %s30, 0
      %p239 = por %p237, %p238
      %p240 = scmp.ne.s32.totalorder %s232, %s234
      %p241 = scmp.eq.s32.totalorder %s35, 1
      %p242 = por %p240, %p241
      %p243 = scmp.ne.s32.totalorder %s234, %s235
      %p244 = scmp.eq.s32.totalorder %s35, 0
      %p245 = por %p243, %p244
      %p246 = scmp.ne.s32.totalorder %s234, %s235
      %p247 = scmp.eq.s32.totalorder %s36, 1
      %p248 = por %p246, %p247
      %p250 = scmp.ne.s32.totalorder %s235, %s249
      %p251 = scmp.eq.s32.totalorder %s36, 0
      %p252 = por %p250, %p251
      %s254 = sadd.s32 %s253, 1
      %p257 = scmp.eq.s32.totalorder %s30, 1
      %p258 = scmp.ne.s32.totalorder %s253, %s255
      %p259 = scmp.eq.s32.totalorder %s30, 0
      %p260 = por %p258, %p259
      %p261 = scmp.ne.s32.totalorder %s253, %s255
      %p262 = scmp.eq.s32.totalorder %s35, 1
      %p263 = por %p261, %p262
      %p264 = scmp.ne.s32.totalorder %s255, %s256
      %p265 = scmp.eq.s32.totalorder %s35, 0
      %p266 = por %p264, %p265
      %p267 = scmp.ne.s32.totalorder %s255, %s256
      %p268 = scmp.eq.s32.totalorder %s36, 1
      %p269 = por %p267, %p268
      %p271 = scmp.ne.s32.totalorder %s256, %s270
      %p272 = scmp.eq.s32.totalorder %s36, 0
      %p273 = por %p271, %p272
      %s275 = sadd.s32 %s274, 1
      %p278 = scmp.eq.s32.totalorder %s30, 1
      %p279 = scmp.ne.s32.totalorder %s274, %s276
      %p280 = scmp.eq.s32.totalorder %s30, 0
      %p281 = por %p279, %p280
      %p282 = scmp.ne.s32.totalorder %s274, %s276
      %p283 = scmp.eq.s32.totalorder %s35, 1
      %p284 = por %p282, %p283
      %p285 = scmp.ne.s32.totalorder %s276, %s277
      %p286 = scmp.eq.s32.totalorder %s35, 0
      %p287 = por %p285, %p286
      %p288 = scmp.ne.s32.totalorder %s276, %s277
      %p289 = scmp.eq.s32.totalorder %s36, 1
      %p290 = por %p288, %p289
      %p292 = scmp.ne.s32.totalorder %s277, %s291
      %p293 = scmp.eq.s32.totalorder %s36, 0
      %p294 = por %p292, %p293
      %s296 = sadd.s32 %s295, 1
      %p299 = scmp.eq.s32.totalorder %s30, 1
      %p300 = scmp.ne.s32.totalorder %s295, %s297
      %p301 = scmp.eq.s32.totalorder %s30, 0
      %p302 = por %p300, %p301
      %p303 = scmp.ne.s32.totalorder %s295, %s297
      %p304 = scmp.eq.s32.totalorder %s35, 1
      %p305 = por %p303, %p304
      %p306 = scmp.ne.s32.totalorder %s297, %s298
      %p307 = scmp.eq.s32.totalorder %s35, 0
      %p308 = por %p306, %p307
      %p309 = scmp.ne.s32.totalorder %s297, %s298
      %p310 = scmp.eq.s32.totalorder %s36, 1
      %p311 = por %p309, %p310
      %p313 = scmp.ne.s32.totalorder %s298, %s312
      %p314 = scmp.eq.s32.totalorder %s36, 0
      %p315 = por %p313, %p314
      %s316 = ssub.s32 %s30, %s37
      %p317 = scmp.eq.s32.totalorder %s316, 0
      %s319 = sadd.s32 %s318, 1
      %s320 = scalar_select %p317, %s318, %s319
      %p323 = pneg %p317
      %p324 = scmp.eq.s32.totalorder %s30, 1
      %p325 = por %p323, %p324
      %p326 = scmp.ne.s32.totalorder %s318, %s321
      %p327 = scmp.eq.s32.totalorder %s30, 0
      %p328 = por %p326, %p327
      %p329 = scmp.ne.s32.totalorder %s318, %s321
      %p330 = scmp.eq.s32.totalorder %s35, 1
      %p331 = por %p329, %p330
      %p332 = scmp.ne.s32.totalorder %s321, %s322
      %p333 = scmp.eq.s32.totalorder %s35, 0
      %p334 = por %p332, %p333
      %p335 = scmp.ne.s32.totalorder %s321, %s322
      %p336 = scmp.eq.s32.totalorder %s36, 1
      %p337 = por %p335, %p336
      %p339 = scmp.ne.s32.totalorder %s322, %s338
      %p340 = scmp.eq.s32.totalorder %s36, 0
      %p341 = por %p339, %p340
      %p342 = scmp.le.s32.totalorder 1, %s30
      %p343 = scmp.lt.s32.totalorder %s30, 3
      %p344 = pnand %p342, %p343
      %p345 = pneg %p344
      // Predicated region
      $region9: #{tpu_custom_call.1} parent=5 // pred_check
        _
      $region10: #{tpu_custom_call.1} parent=5 // pred_check_branch
        %347 = sbr.rel (%p344) target = $region12
      $region11: #{tpu_custom_call.1} parent=5 // pred_region
        %s348 = ssub.s32 %s30, 1
        // Predicated region
        $region13: #{tpu_custom_call.1} parent=11 // pred_check
          %p349 = pneg %p77
        $region14: #{tpu_custom_call.1} parent=11 // pred_check_branch
          %351 = sbr.rel (%p349) target = $region16
        $region15: #{tpu_custom_call.1} parent=11 // pred_region
          %s353 = ssub.s32 128, 128
          %354 = vsyncadd [#allocation6], %s353
          %s356 = sshll.u32 [#allocation5], 4
          %s357 = int_to_ptr.vmem [resolvable:$true] %s356
          %359 = dma.hbm_to_vmem [thread:$0]  %s1, 128, %s357, [#allocation6]
        $region16: #{tpu_custom_call.1} parent=11 // pred_fallthru
          _
        // Predicated region
        $region17: #{tpu_custom_call.1} parent=11 // pred_check
          %p360 = pneg %p98
        $region18: #{tpu_custom_call.1} parent=11 // pred_check_branch
          %362 = sbr.rel (%p360) target = $region20
        $region19: #{tpu_custom_call.1} parent=11 // pred_region
          %s364 = ssub.s32 128, 128
          %365 = vsyncadd [#allocation6], %s364
          %s367 = sshll.u32 [#allocation7], 4
          %s368 = int_to_ptr.vmem [resolvable:$true] %s367
          %370 = dma.hbm_to_vmem [thread:$0]  %s2, 128, %s368, [#allocation6]
        $region20: #{tpu_custom_call.1} parent=11 // pred_fallthru
          _
        // Predicated region
        $region21: #{tpu_custom_call.1} parent=11 // pred_check
          %p371 = pneg %p119
        $region22: #{tpu_custom_call.1} parent=11 // pred_check_branch
          %373 = sbr.rel (%p371) target = $region24
        $region23: #{tpu_custom_call.1} parent=11 // pred_region
          _
        $region24: #{tpu_custom_call.1} parent=11 // pred_fallthru
          _
        // Predicated region
        $region25: #{tpu_custom_call.1} parent=11 // pred_check
          %p374 = pneg %p140
        $region26: #{tpu_custom_call.1} parent=11 // pred_check_branch
          %376 = sbr.rel (%p374) target = $region28
        $region27: #{tpu_custom_call.1} parent=11 // pred_region
          %s378 = ssub.s32 128, 128
          %379 = vsyncadd [#allocation9], %s378
          %s381 = sshll.u32 [#allocation8], 4
          %s382 = int_to_ptr.vmem [resolvable:$true] %s381
          %384 = dma.hbm_to_vmem [thread:$0]  %s4, 128, %s382, [#allocation9]
        $region28: #{tpu_custom_call.1} parent=11 // pred_fallthru
          _
        // Predicated region
        $region29: #{tpu_custom_call.1} parent=11 // pred_check
          %p385 = pneg %p161
        $region30: #{tpu_custom_call.1} parent=11 // pred_check_branch
          %387 = sbr.rel (%p385) target = $region32
        $region31: #{tpu_custom_call.1} parent=11 // pred_region
          %s389 = ssub.s32 1024, 1024
          %390 = vsyncadd [#allocation9], %s389
          %s391 = sshll.u32 [#allocation10], 4
          %s392 = int_to_ptr.vmem [resolvable:$true] %s391
          %397 = dma.hbm_to_vmem [thread:$0]  %s5, 1024, %s392, [#allocation9], 64, 64, 4
        $region32: #{tpu_custom_call.1} parent=11 // pred_fallthru
          _
        // Predicated region
        $region33: #{tpu_custom_call.1} parent=11 // pred_check
          %p398 = pneg %p182
        $region34: #{tpu_custom_call.1} parent=11 // pred_check_branch
          %400 = sbr.rel (%p398) target = $region36
        $region35: #{tpu_custom_call.1} parent=11 // pred_region
          %s402 = ssub.s32 1024, 1024
          %403 = vsyncadd [#allocation12], %s402
          %s404 = sshll.u32 [#allocation11], 4
          %s405 = int_to_ptr.vmem [resolvable:$true] %s404
          %410 = dma.hbm_to_vmem [thread:$0]  %s6, 1024, %s405, [#allocation12], 64, 64, 4
        $region36: #{tpu_custom_call.1} parent=11 // pred_fallthru
          _
        // Predicated region
        $region37: #{tpu_custom_call.1} parent=11 // pred_check
          %p411 = pneg %p203
        $region38: #{tpu_custom_call.1} parent=11 // pred_check_branch
          %413 = sbr.rel (%p411) target = $region40
        $region39: #{tpu_custom_call.1} parent=11 // pred_region
          %s415 = ssub.s32 1024, 1024
          %416 = vsyncadd [#allocation12], %s415
          %s417 = sshll.u32 [#allocation13], 4
          %s418 = int_to_ptr.vmem [resolvable:$true] %s417
          %423 = dma.hbm_to_vmem [thread:$0]  %s7, 1024, %s418, [#allocation12], 64, 64, 4
        $region40: #{tpu_custom_call.1} parent=11 // pred_fallthru
          _
        // Predicated region
        $region41: #{tpu_custom_call.1} parent=11 // pred_check
          %p424 = pneg %p224
        $region42: #{tpu_custom_call.1} parent=11 // pred_check_branch
          %426 = sbr.rel (%p424) target = $region44
        $region43: #{tpu_custom_call.1} parent=11 // pred_region
          %s428 = ssub.s32 1024, 1024
          %429 = vsyncadd [#allocation15], %s428
          %s430 = sshll.u32 [#allocation14], 4
          %s431 = int_to_ptr.vmem [resolvable:$true] %s430
          %436 = dma.hbm_to_vmem [thread:$0]  %s8, 1024, %s431, [#allocation15], 64, 64, 4
        $region44: #{tpu_custom_call.1} parent=11 // pred_fallthru
          _
        // Predicated region
        $region45: #{tpu_custom_call.1} parent=11 // pred_check
          %p437 = pneg %p245
        $region46: #{tpu_custom_call.1} parent=11 // pred_check_branch
          %439 = sbr.rel (%p437) target = $region48
        $region47: #{tpu_custom_call.1} parent=11 // pred_region
          %s441 = ssub.s32 4096, 4096
          %442 = vsyncadd [#allocation15], %s441
          %s443 = sshll.u32 [#allocation16], 4
          %s444 = int_to_ptr.vmem [resolvable:$true] %s443
          %449 = dma.hbm_to_vmem [thread:$0]  %s9, 4096, %s444, [#allocation15], 256, 256, 16
        $region48: #{tpu_custom_call.1} parent=11 // pred_fallthru
          _
        // Predicated region
        $region49: #{tpu_custom_call.1} parent=11 // pred_check
          %p450 = pneg %p266
        $region50: #{tpu_custom_call.1} parent=11 // pred_check_branch
          %452 = sbr.rel (%p450) target = $region52
        $region51: #{tpu_custom_call.1} parent=11 // pred_region
          %s454 = ssub.s32 2048, 2048
          %455 = vsyncadd [#allocation18], %s454
          %s456 = sshll.u32 [#allocation17], 4
          %s457 = int_to_ptr.vmem [resolvable:$true] %s456
          %462 = dma.hbm_to_vmem [thread:$0]  %s10, 2048, %s457, [#allocation18], 64, 64, 4
        $region52: #{tpu_custom_call.1} parent=11 // pred_fallthru
          _
        // Predicated region
        $region53: #{tpu_custom_call.1} parent=11 // pred_check
          %p463 = pneg %p287
        $region54: #{tpu_custom_call.1} parent=11 // pred_check_branch
          %465 = sbr.rel (%p463) target = $region56
        $region55: #{tpu_custom_call.1} parent=11 // pred_region
          _
        $region56: #{tpu_custom_call.1} parent=11 // pred_fallthru
          _
        // Predicated region
        $region57: #{tpu_custom_call.1} parent=11 // pred_check
          %p466 = pneg %p308
        $region58: #{tpu_custom_call.1} parent=11 // pred_check_branch
          %468 = sbr.rel (%p466) target = $region60
        $region59: #{tpu_custom_call.1} parent=11 // pred_region
          _
        $region60: #{tpu_custom_call.1} parent=11 // pred_fallthru
          _
      $region12: #{tpu_custom_call.1} parent=5 // pred_fallthru
        _
      %p469 = scmp.lt.s32.totalorder %s30, 2
      // Predicated region
      $region61: #{tpu_custom_call.1} parent=5 // pred_check
        %p470 = pneg %p469
      $region62: #{tpu_custom_call.1} parent=5 // pred_check_branch
        %472 = sbr.rel (%p470) target = $region64
      $region63: #{tpu_custom_call.1} parent=5 // pred_region
        // Predicated region
        $region65: #{tpu_custom_call.1} parent=63 // pred_check
          %p473 = pneg %p50
        $region66: #{tpu_custom_call.1} parent=63 // pred_check_branch
          %475 = sbr.rel (%p473) target = $region68
        $region67: #{tpu_custom_call.1} parent=63 // pred_region
          %s476 = sand.u32 %s40, 1
          %s477 = scalar_lea.sflag [#allocation3], %s476
          %s478 = sand.u32 %s40, 1
          %s479 = smul.addr %s478, 8
          %s480 = scalar_lea.vmem [#allocation2], %s479
          %s482 = ssub.s32 128, 128
          %483 = vsyncadd %s477, %s482
          %s484 = smul.addr %s30, 128
          %s485 = scalar_lea.hbm %s0, %s484
          %s487 = sshll.u32 %s480, 4
          %s488 = int_to_ptr.vmem [resolvable:$true] %s487
          %490 = dma.hbm_to_vmem [thread:$0]  %s485, 128, %s488, %s477
        $region68: #{tpu_custom_call.1} parent=63 // pred_fallthru
          _
      $region64: #{tpu_custom_call.1} parent=5 // pred_fallthru
        _
      %p491 = scmp.le.s32.totalorder 1, %s30
      %p492 = scmp.lt.s32.totalorder %s30, 3
      %p493 = pnand %p491, %p492
      %p494 = pneg %p493
      // Predicated region
      $region69: #{tpu_custom_call.1} parent=5 // pred_check
        _
      $region70: #{tpu_custom_call.1} parent=5 // pred_check_branch
        %496 = sbr.rel (%p493) target = $region72
      $region71: #{tpu_custom_call.1} parent=5 // pred_region
        %s497 = ssub.s32 %s30, 1
        %s498 = sand.u32 %s43, 1
        %s499 = scalar_lea.sflag [#allocation3], %s498
        %s500 = sand.u32 %s43, 1
        %s501 = smul.addr %s500, 8
        %s502 = scalar_lea.vmem [#allocation2], %s501
        // Predicated region
        $region73: #{tpu_custom_call.1} parent=71 // pred_check
          %p503 = pneg %p56
        $region74: #{tpu_custom_call.1} parent=71 // pred_check_branch
          %505 = sbr.rel (%p503) target = $region76
        $region75: #{tpu_custom_call.1} parent=71 // pred_region
          %506 = dma.done %s499, 128
        $region76: #{tpu_custom_call.1} parent=71 // pred_fallthru
          _
        // Predicated region
        $region77: #{tpu_custom_call.1} parent=71 // pred_check
          %p507 = pneg %p77
        $region78: #{tpu_custom_call.1} parent=71 // pred_check_branch
          %509 = sbr.rel (%p507) target = $region80
        $region79: #{tpu_custom_call.1} parent=71 // pred_region
          %510 = dma.done [#allocation6], 128
        $region80: #{tpu_custom_call.1} parent=71 // pred_fallthru
          _
        // Predicated region
        $region81: #{tpu_custom_call.1} parent=71 // pred_check
          %p511 = pneg %p98
        $region82: #{tpu_custom_call.1} parent=71 // pred_check_branch
          %513 = sbr.rel (%p511) target = $region84
        $region83: #{tpu_custom_call.1} parent=71 // pred_region
          %514 = dma.done [#allocation6], 128
        $region84: #{tpu_custom_call.1} parent=71 // pred_fallthru
          _
        // Predicated region
        $region85: #{tpu_custom_call.1} parent=71 // pred_check
          %p515 = pneg %p140
        $region86: #{tpu_custom_call.1} parent=71 // pred_check_branch
          %517 = sbr.rel (%p515) target = $region88
        $region87: #{tpu_custom_call.1} parent=71 // pred_region
          %518 = dma.done [#allocation9], 128
        $region88: #{tpu_custom_call.1} parent=71 // pred_fallthru
          _
        // Predicated region
        $region89: #{tpu_custom_call.1} parent=71 // pred_check
          %p519 = pneg %p161
        $region90: #{tpu_custom_call.1} parent=71 // pred_check_branch
          %521 = sbr.rel (%p519) target = $region92
        $region91: #{tpu_custom_call.1} parent=71 // pred_region
          %522 = dma.done [#allocation9], 1024
        $region92: #{tpu_custom_call.1} parent=71 // pred_fallthru
          _
        // Predicated region
        $region93: #{tpu_custom_call.1} parent=71 // pred_check
          %p523 = pneg %p182
        $region94: #{tpu_custom_call.1} parent=71 // pred_check_branch
          %525 = sbr.rel (%p523) target = $region96
        $region95: #{tpu_custom_call.1} parent=71 // pred_region
          %526 = dma.done [#allocation12], 1024
        $region96: #{tpu_custom_call.1} parent=71 // pred_fallthru
          _
        // Predicated region
        $region97: #{tpu_custom_call.1} parent=71 // pred_check
          %p527 = pneg %p203
        $region98: #{tpu_custom_call.1} parent=71 // pred_check_branch
          %529 = sbr.rel (%p527) target = $region100
        $region99: #{tpu_custom_call.1} parent=71 // pred_region
          %530 = dma.done [#allocation12], 1024
        $region100: #{tpu_custom_call.1} parent=71 // pred_fallthru
          _
        // Predicated region
        $region101: #{tpu_custom_call.1} parent=71 // pred_check
          %p531 = pneg %p224
        $region102: #{tpu_custom_call.1} parent=71 // pred_check_branch
          %533 = sbr.rel (%p531) target = $region104
        $region103: #{tpu_custom_call.1} parent=71 // pred_region
          %534 = dma.done [#allocation15], 1024
        $region104: #{tpu_custom_call.1} parent=71 // pred_fallthru
          _
        // Predicated region
        $region105: #{tpu_custom_call.1} parent=71 // pred_check
          %p535 = pneg %p245
        $region106: #{tpu_custom_call.1} parent=71 // pred_check_branch
          %537 = sbr.rel (%p535) target = $region108
        $region107: #{tpu_custom_call.1} parent=71 // pred_region
          %538 = dma.done [#allocation15], 4096
        $region108: #{tpu_custom_call.1} parent=71 // pred_fallthru
          _
        // Predicated region
        $region109: #{tpu_custom_call.1} parent=71 // pred_check
          %p539 = pneg %p266
        $region110: #{tpu_custom_call.1} parent=71 // pred_check_branch
          %541 = sbr.rel (%p539) target = $region112
        $region111: #{tpu_custom_call.1} parent=71 // pred_region
          %542 = dma.done [#allocation18], 2048
        $region112: #{tpu_custom_call.1} parent=71 // pred_fallthru
          _
        %s543 = sand.u32 %s43, 1
        %s544 = scalar_lea.sflag [#allocation3], %s543
        %s545 = sand.u32 %s43, 1
        %s546 = smul.addr %s545, 8
        %s547 = scalar_lea.vmem [#allocation2], %s546
        %p548 = pneg %p56
        %p549 = pneg %p53
        %p550 = pneg %p77
        %p551 = pneg %p74
        %p552 = pneg %p98
        %p553 = pneg %p95
        %p554 = pneg %p119
        %p555 = pneg %p116
        %p556 = pneg %p140
        %p557 = pneg %p137
        %p558 = pneg %p161
        %p559 = pneg %p158
        %p560 = pneg %p182
        %p561 = pneg %p179
        %p562 = pneg %p203
        %p563 = pneg %p200
        %p564 = pneg %p224
        %p565 = pneg %p221
        %p566 = pneg %p245
        %p567 = pneg %p242
        %p568 = pneg %p266
        %p569 = pneg %p263
        %p570 = pneg %p287
        %p571 = pneg %p284
        %p572 = pneg %p308
        %p573 = pneg %p305
        %p574 = pneg %p334
        %p575 = pneg %p331
        %s576 = sand.u32 %s321, 1
        %s577 = scalar_lea.sflag [#allocation4], %s576
        %s578 = sand.u32 %s321, 1
        %s579 = smul.addr %s578, 8
        %s580 = scalar_lea.vmem [#allocation19], %s579
        %v582 = vld [vmem:[%s502] sm:$0xff]
        %v583 = vld [vmem:[#allocation10] sm:$0xf]
        %v584 = vld [vmem:[#allocation10 + $0x4] sm:$0xf]
        %v585 = vld [vmem:[#allocation10 + $0x8] sm:$0xf]
        %v586 = vld [vmem:[#allocation10 + $0xc] sm:$0xf]
        %v587 = vld [vmem:[#allocation10 + $0x10] sm:$0xf]
        %v588 = vld [vmem:[#allocation10 + $0x14] sm:$0xf]
        %v589 = vld [vmem:[#allocation10 + $0x18] sm:$0xf]
        %v590 = vld [vmem:[#allocation10 + $0x1c] sm:$0xf]
        %v591 = vld [vmem:[#allocation10 + $0x20] sm:$0xf]
        %v592 = vld [vmem:[#allocation10 + $0x24] sm:$0xf]
        %v593 = vld [vmem:[#allocation10 + $0x28] sm:$0xf]
        %v594 = vld [vmem:[#allocation10 + $0x2c] sm:$0xf]
        %v595 = vld [vmem:[#allocation10 + $0x30] sm:$0xf]
        %v596 = vld [vmem:[#allocation10 + $0x34] sm:$0xf]
        %v597 = vld [vmem:[#allocation10 + $0x38] sm:$0xf]
        %v598 = vld [vmem:[#allocation10 + $0x3c] sm:$0xf]
        %v599 = vld [vmem:[%s11] sm:$0x1]
        %v600 = vmul.f32 %v582, %v582
        %601 = vadd.xlane.f32.xlu0 %v600
        %v602 = vpop.xlane.xlu0 %601
        %v603 = vrcp.pop 128.0
        %v604 = vmul.f32 %v602, %v603
        %v605 = vadd.f32 %v604, 1e-06
        %v606 = vrsqrt.pop %v605
        %v607 = vmul.f32 %v582, %v606
        %v609 = vlaneseq
        %v610 = vshrl.u32 %v609, 7
        %v611 = vsub.s32 0, %v610
        %v612 = vrot.slane %v599, %v611
        %v614 = vmul.f32 %v607, %v612
        %v615 = vpack.c.bf16 %v614, %v614
        %v616 = vld [vmem:[#allocation11] sm:$0xf]
        %v617 = vld [vmem:[#allocation11 + $0x4] sm:$0xf]
        %v618 = vld [vmem:[#allocation11 + $0x8] sm:$0xf]
        %v619 = vld [vmem:[#allocation11 + $0xc] sm:$0xf]
        %v620 = vld [vmem:[#allocation11 + $0x10] sm:$0xf]
        %v621 = vld [vmem:[#allocation11 + $0x14] sm:$0xf]
        %v622 = vld [vmem:[#allocation11 + $0x18] sm:$0xf]
        %v623 = vld [vmem:[#allocation11 + $0x1c] sm:$0xf]
        %v624 = vld [vmem:[#allocation11 + $0x20] sm:$0xf]
        %v625 = vld [vmem:[#allocation11 + $0x24] sm:$0xf]
        %v626 = vld [vmem:[#allocation11 + $0x28] sm:$0xf]
        %v627 = vld [vmem:[#allocation11 + $0x2c] sm:$0xf]
        %v628 = vld [vmem:[#allocation11 + $0x30] sm:$0xf]
        %v629 = vld [vmem:[#allocation11 + $0x34] sm:$0xf]
        %v630 = vld [vmem:[#allocation11 + $0x38] sm:$0xf]
        %v631 = vld [vmem:[#allocation11 + $0x3c] sm:$0xf]
        %v648 = vunpack.c.l.b16 %v616
        %v649 = vunpack.c.l.b16 %v617
        %v650 = vunpack.c.l.b16 %v618
        %v651 = vunpack.c.l.b16 %v619
        %v652 = vunpack.c.l.b16 %v620
        %v653 = vunpack.c.l.b16 %v621
        %v654 = vunpack.c.l.b16 %v622
        %v655 = vunpack.c.l.b16 %v623
        %v656 = vunpack.c.l.b16 %v624
        %v657 = vunpack.c.l.b16 %v625
        %v658 = vunpack.c.l.b16 %v626
        %v659 = vunpack.c.l.b16 %v627
        %v660 = vunpack.c.l.b16 %v628
        %v661 = vunpack.c.l.b16 %v629
        %v662 = vunpack.c.l.b16 %v630
        %v663 = vunpack.c.l.b16 %v631
        %v664 = vpack.c.b16 %v649, %v648
        %v665 = vpack.c.b16 %v651, %v650
        %v666 = vpack.c.b16 %v653, %v652
        %v667 = vpack.c.b16 %v655, %v654
        %v668 = vpack.c.b16 %v657, %v656
        %v669 = vpack.c.b16 %v659, %v658
        %v670 = vpack.c.b16 %v661, %v660
        %v671 = vpack.c.b16 %v663, %v662
        %680 = vmatprep.subr.bf16.mxu0 0
        %681 = vmatpush1.bf16.msra.mxu0 %v664
        %682 = vmatprep.subr.bf16.mxu0 0
        %683 = vmatpush1.bf16.msra.mxu0 %v665
        %684 = vmatprep.subr.bf16.mxu0 0
        %685 = vmatpush1.bf16.msra.mxu0 %v666
        %686 = vmatprep.subr.bf16.mxu0 0
        %687 = vmatpush1.bf16.msra.mxu0 %v667
        %688 = vmatprep.subr.bf16.mxu0 0
        %689 = vmatpush1.bf16.msra.mxu0 %v668
        %690 = vmatprep.subr.bf16.mxu0 0
        %691 = vmatpush1.bf16.msra.mxu0 %v669
        %692 = vmatprep.subr.bf16.mxu0 0
        %693 = vmatpush1.bf16.msra.mxu0 %v670
        %694 = vmatprep.subr.bf16.mxu0 0
        %695 = vmatpush1.bf16.msra.mxu0 %v671
        %696 = vmatprep.subr.bf16.mxu0 0
        %697 = vmatpush1.bf16.msra.mxu0 0
        %698 = vmatprep.subr.bf16.mxu0 0
        %699 = vmatpush1.bf16.msra.mxu0 0
        %700 = vmatprep.subr.bf16.mxu0 0
        %701 = vmatpush1.bf16.msra.mxu0 0
        %702 = vmatprep.subr.bf16.mxu0 0
        %703 = vmatpush1.bf16.msra.mxu0 0
        %704 = vmatprep.subr.bf16.mxu0 0
        %705 = vmatpush1.bf16.msra.mxu0 0
        %706 = vmatprep.subr.bf16.mxu0 0
        %707 = vmatpush1.bf16.msra.mxu0 0
        %708 = vmatprep.subr.bf16.mxu0 0
        %709 = vmatpush1.bf16.msra.mxu0 0
        %710 = vmatprep.subr.bf16.mxu0 0
        %711 = vmatpush1.bf16.msra.mxu0 0
        %712 = vmatprep.mubr.bf16.mxu0 0
        %713 = vmatmul.mubr.bf16.gmra.mrb[0].mxu0 %v615
        %v714 = vpop.f32.mrb[0].mxu0
        %v715 = vadd.f32 0.0, %v714
        %v716 = vpop.f32.mrb[0].mxu0
        %v717 = vpop.f32.mrb[0].mxu0
        %v718 = vpop.f32.mrb[0].mxu0
        %719 = vdwg.mxu0
        %v720 = vld [vmem:[#allocation13] sm:$0xf]
        %v721 = vld [vmem:[#allocation13 + $0x4] sm:$0xf]
        %v722 = vld [vmem:[#allocation13 + $0x8] sm:$0xf]
        %v723 = vld [vmem:[#allocation13 + $0xc] sm:$0xf]
        %v724 = vld [vmem:[#allocation13 + $0x10] sm:$0xf]
        %v725 = vld [vmem:[#allocation13 + $0x14] sm:$0xf]
        %v726 = vld [vmem:[#allocation13 + $0x18] sm:$0xf]
        %v727 = vld [vmem:[#allocation13 + $0x1c] sm:$0xf]
        %v728 = vld [vmem:[#allocation13 + $0x20] sm:$0xf]
        %v729 = vld [vmem:[#allocation13 + $0x24] sm:$0xf]
        %v730 = vld [vmem:[#allocation13 + $0x28] sm:$0xf]
        %v731 = vld [vmem:[#allocation13 + $0x2c] sm:$0xf]
        %v732 = vld [vmem:[#allocation13 + $0x30] sm:$0xf]
        %v733 = vld [vmem:[#allocation13 + $0x34] sm:$0xf]
        %v734 = vld [vmem:[#allocation13 + $0x38] sm:$0xf]
        %v735 = vld [vmem:[#allocation13 + $0x3c] sm:$0xf]
        %v752 = vunpack.c.l.b16 %v720
        %v753 = vunpack.c.l.b16 %v721
        %v754 = vunpack.c.l.b16 %v722
        %v755 = vunpack.c.l.b16 %v723
        %v756 = vunpack.c.l.b16 %v724
        %v757 = vunpack.c.l.b16 %v725
        %v758 = vunpack.c.l.b16 %v726
        %v759 = vunpack.c.l.b16 %v727
        %v760 = vunpack.c.l.b16 %v728
        %v761 = vunpack.c.l.b16 %v729
        %v762 = vunpack.c.l.b16 %v730
        %v763 = vunpack.c.l.b16 %v731
        %v764 = vunpack.c.l.b16 %v732
        %v765 = vunpack.c.l.b16 %v733
        %v766 = vunpack.c.l.b16 %v734
        %v767 = vunpack.c.l.b16 %v735
        %v768 = vpack.c.b16 %v753, %v752
        %v769 = vpack.c.b16 %v755, %v754
        %v770 = vpack.c.b16 %v757, %v756
        %v771 = vpack.c.b16 %v759, %v758
        %v772 = vpack.c.b16 %v761, %v760
        %v773 = vpack.c.b16 %v763, %v762
        %v774 = vpack.c.b16 %v765, %v764
        %v775 = vpack.c.b16 %v767, %v766
        %784 = vmatprep.subr.bf16.mxu0 0
        %785 = vmatpush1.bf16.msra.mxu0 %v768
        %786 = vmatprep.subr.bf16.mxu0 0
        %787 = vmatpush1.bf16.msra.mxu0 %v769
        %788 = vmatprep.subr.bf16.mxu0 0
        %789 = vmatpush1.bf16.msra.mxu0 %v770
        %790 = vmatprep.subr.bf16.mxu0 0
        %791 = vmatpush1.bf16.msra.mxu0 %v771
        %792 = vmatprep.subr.bf16.mxu0 0
        %793 = vmatpush1.bf16.msra.mxu0 %v772
        %794 = vmatprep.subr.bf16.mxu0 0
        %795 = vmatpush1.bf16.msra.mxu0 %v773
        %796 = vmatprep.subr.bf16.mxu0 0
        %797 = vmatpush1.bf16.msra.mxu0 %v774
        %798 = vmatprep.subr.bf16.mxu0 0
        %799 = vmatpush1.bf16.msra.mxu0 %v775
        %800 = vmatprep.subr.bf16.mxu0 0
        %801 = vmatpush1.bf16.msra.mxu0 0
        %802 = vmatprep.subr.bf16.mxu0 0
        %803 = vmatpush1.bf16.msra.mxu0 0
        %804 = vmatprep.subr.bf16.mxu0 0
        %805 = vmatpush1.bf16.msra.mxu0 0
        %806 = vmatprep.subr.bf16.mxu0 0
        %807 = vmatpush1.bf16.msra.mxu0 0
        %808 = vmatprep.subr.bf16.mxu0 0
        %809 = vmatpush1.bf16.msra.mxu0 0
        %810 = vmatprep.subr.bf16.mxu0 0
        %811 = vmatpush1.bf16.msra.mxu0 0
        %812 = vmatprep.subr.bf16.mxu0 0
        %813 = vmatpush1.bf16.msra.mxu0 0
        %814 = vmatprep.subr.bf16.mxu0 0
        %815 = vmatpush1.bf16.msra.mxu0 0
        %816 = vmatprep.mubr.bf16.mxu0 0
        %817 = vmatmul.mubr.bf16.gmra.mrb[0].mxu0 %v615
        %v818 = vpop.f32.mrb[0].mxu0
        %v819 = vadd.f32 0.0, %v818
        %v820 = vpop.f32.mrb[0].mxu0
        %v821 = vpop.f32.mrb[0].mxu0
        %v822 = vpop.f32.mrb[0].mxu0
        %823 = vdwg.mxu0
        %v824 = vld [vmem:[#allocation5] sm:$0xff]
        %v825 = vld [vmem:[#allocation7] sm:$0xff]
        %v826 = vmul.f32 %v715, %v824
        %v827 = vpack.c.bf16 %v715, %v715
        %v844 = vunpack.c.l.b16 %v583
        %v845 = vunpack.c.l.b16 %v584
        %v846 = vunpack.c.l.b16 %v585
        %v847 = vunpack.c.l.b16 %v586
        %v848 = vunpack.c.l.b16 %v587
        %v849 = vunpack.c.l.b16 %v588
        %v850 = vunpack.c.l.b16 %v589
        %v851 = vunpack.c.l.b16 %v590
        %v852 = vunpack.c.l.b16 %v591
        %v853 = vunpack.c.l.b16 %v592
        %v854 = vunpack.c.l.b16 %v593
        %v855 = vunpack.c.l.b16 %v594
        %v856 = vunpack.c.l.b16 %v595
        %v857 = vunpack.c.l.b16 %v596
        %v858 = vunpack.c.l.b16 %v597
        %v859 = vunpack.c.l.b16 %v598
        %v860 = vpack.c.b16 %v845, %v844
        %v861 = vpack.c.b16 %v847, %v846
        %v862 = vpack.c.b16 %v849, %v848
        %v863 = vpack.c.b16 %v851, %v850
        %v864 = vpack.c.b16 %v853, %v852
        %v865 = vpack.c.b16 %v855, %v854
        %v866 = vpack.c.b16 %v857, %v856
        %v867 = vpack.c.b16 %v859, %v858
        %876 = vmatprep.subr.bf16.mxu0 0
        %877 = vmatpush1.bf16.msra.mxu0 %v860
        %878 = vmatprep.subr.bf16.mxu0 0
        %879 = vmatpush1.bf16.msra.mxu0 %v861
        %880 = vmatprep.subr.bf16.mxu0 0
        %881 = vmatpush1.bf16.msra.mxu0 %v862
        %882 = vmatprep.subr.bf16.mxu0 0
        %883 = vmatpush1.bf16.msra.mxu0 %v863
        %884 = vmatprep.subr.bf16.mxu0 0
        %885 = vmatpush1.bf16.msra.mxu0 %v864
        %886 = vmatprep.subr.bf16.mxu0 0
        %887 = vmatpush1.bf16.msra.mxu0 %v865
        %888 = vmatprep.subr.bf16.mxu0 0
        %889 = vmatpush1.bf16.msra.mxu0 %v866
        %890 = vmatprep.subr.bf16.mxu0 0
        %891 = vmatpush1.bf16.msra.mxu0 %v867
        %892 = vmatprep.subr.bf16.mxu0 0
        %893 = vmatpush1.bf16.msra.mxu0 0
        %894 = vmatprep.subr.bf16.mxu0 0
        %895 = vmatpush1.bf16.msra.mxu0 0
        %896 = vmatprep.subr.bf16.mxu0 0
        %897 = vmatpush1.bf16.msra.mxu0 0
        %898 = vmatprep.subr.bf16.mxu0 0
        %899 = vmatpush1.bf16.msra.mxu0 0
        %900 = vmatprep.subr.bf16.mxu0 0
        %901 = vmatpush1.bf16.msra.mxu0 0
        %902 = vmatprep.subr.bf16.mxu0 0
        %903 = vmatpush1.bf16.msra.mxu0 0
        %904 = vmatprep.subr.bf16.mxu0 0
        %905 = vmatpush1.bf16.msra.mxu0 0
        %906 = vmatprep.subr.bf16.mxu0 0
        %907 = vmatpush1.bf16.msra.mxu0 0
        %908 = vmatprep.mubr.bf16.mxu0 0
        %909 = vmatmul.mubr.bf16.gmra.mrb[0].mxu0 %v827
        %v910 = vpop.f32.mrb[0].mxu0
        %v911 = vadd.f32 0.0, %v910
        %v912 = vpop.f32.mrb[0].mxu0
        %v913 = vpop.f32.mrb[0].mxu0
        %v914 = vpop.f32.mrb[0].mxu0
        %915 = vdwg.mxu0
        %v916 = vmul.f32 %v911, %v825
        %v917 = vadd.f32 %v826, %v916
        %v918 = vld [vmem:[%s3] sm:$0xff]
        %v919 = vld [vmem:[#allocation8] sm:$0xff]
        %v920 = vmul.f32 %v819, %v918
        %v921 = vpack.c.bf16 %v819, %v819
        %922 = vmatprep.subr.bf16.mxu0 0
        %923 = vmatpush1.bf16.msra.mxu0 %v860
        %924 = vmatprep.subr.bf16.mxu0 0
        %925 = vmatpush1.bf16.msra.mxu0 %v861
        %926 = vmatprep.subr.bf16.mxu0 0
        %927 = vmatpush1.bf16.msra.mxu0 %v862
        %928 = vmatprep.subr.bf16.mxu0 0
        %929 = vmatpush1.bf16.msra.mxu0 %v863
        %930 = vmatprep.subr.bf16.mxu0 0
        %931 = vmatpush1.bf16.msra.mxu0 %v864
        %932 = vmatprep.subr.bf16.mxu0 0
        %933 = vmatpush1.bf16.msra.mxu0 %v865
        %934 = vmatprep.subr.bf16.mxu0 0
        %935 = vmatpush1.bf16.msra.mxu0 %v866
        %936 = vmatprep.subr.bf16.mxu0 0
        %937 = vmatpush1.bf16.msra.mxu0 %v867
        %938 = vmatprep.subr.bf16.mxu0 0
        %939 = vmatpush1.bf16.msra.mxu0 0
        %940 = vmatprep.subr.bf16.mxu0 0
        %941 = vmatpush1.bf16.msra.mxu0 0
        %942 = vmatprep.subr.bf16.mxu0 0
        %943 = vmatpush1.bf16.msra.mxu0 0
        %944 = vmatprep.subr.bf16.mxu0 0
        %945 = vmatpush1.bf16.msra.mxu0 0
        %946 = vmatprep.subr.bf16.mxu0 0
        %947 = vmatpush1.bf16.msra.mxu0 0
        %948 = vmatprep.subr.bf16.mxu0 0
        %949 = vmatpush1.bf16.msra.mxu0 0
        %950 = vmatprep.subr.bf16.mxu0 0
        %951 = vmatpush1.bf16.msra.mxu0 0
        %952 = vmatprep.subr.bf16.mxu0 0
        %953 = vmatpush1.bf16.msra.mxu0 0
        %954 = vmatprep.mubr.bf16.mxu0 0
        %955 = vmatmul.mubr.bf16.gmra.mrb[0].mxu0 %v921
        %v956 = vpop.f32.mrb[0].mxu0
        %v957 = vadd.f32 0.0, %v956
        %v958 = vpop.f32.mrb[0].mxu0
        %v959 = vpop.f32.mrb[0].mxu0
        %v960 = vpop.f32.mrb[0].mxu0
        %961 = vdwg.mxu0
        %v962 = vmul.f32 %v957, %v919
        %v963 = vadd.f32 %v920, %v962
        %v964 = vpack.c.bf16 %v917, %v917
        %v965 = vpack.c.bf16 %v963, %v963
        %v966 = vlaneseq
        %v967 = vshrl.u32 %v966, 7
        %v968 = vlaneseq
        %v969 = vand.u32 %v968, 127
        %vm970 = vcmp.le.s32.totalorder %v969, %v967
        %vm971 = vcmask 261120
        %v973 = vsel %vm971, %v964, 0
        %v976 = vsel %vm971, %v965, 0
        %978 = vmatprep.subr.bf16.mxu0 0
        %979 = vmatpush1.bf16.xpose.msra.mxu0 %v976
        %980 = vmatprep.subr.bf16.mxu0 0
        %981 = vmatpush1.bf16.xpose.msra.mxu0 0
        %982 = vmatprep.subr.bf16.mxu0 0
        %983 = vmatpush1.bf16.xpose.msra.mxu0 0
        %984 = vmatprep.subr.bf16.mxu0 0
        %985 = vmatpush1.bf16.xpose.msra.mxu0 0
        %986 = vmatprep.subr.bf16.mxu0 0
        %987 = vmatpush1.bf16.xpose.msra.mxu0 0
        %988 = vmatprep.subr.bf16.mxu0 0
        %989 = vmatpush1.bf16.xpose.msra.mxu0 0
        %990 = vmatprep.subr.bf16.mxu0 0
        %991 = vmatpush1.bf16.xpose.msra.mxu0 0
        %992 = vmatprep.subr.bf16.mxu0 0
        %993 = vmatpush1.bf16.xpose.msra.mxu0 0
        %994 = vmatprep.subr.bf16.mxu0 0
        %995 = vmatpush1.bf16.xpose.msra.mxu0 0
        %996 = vmatprep.subr.bf16.mxu0 0
        %997 = vmatpush1.bf16.xpose.msra.mxu0 0
        %998 = vmatprep.subr.bf16.mxu0 0
        %999 = vmatpush1.bf16.xpose.msra.mxu0 0
        %1000 = vmatprep.subr.bf16.mxu0 0
        %1001 = vmatpush1.bf16.xpose.msra.mxu0 0
        %1002 = vmatprep.subr.bf16.mxu0 0
        %1003 = vmatpush1.bf16.xpose.msra.mxu0 0
        %1004 = vmatprep.subr.bf16.mxu0 0
        %1005 = vmatpush1.bf16.xpose.msra.mxu0 0
        %1006 = vmatprep.subr.bf16.mxu0 0
        %1007 = vmatpush1.bf16.xpose.msra.mxu0 0
        %1008 = vmatprep.subr.bf16.mxu0 0
        %1009 = vmatpush1.bf16.xpose.msra.mxu0 0
        %1010 = vmatprep.mubr.bf16.mxu0 0
        %1011 = vmatmul.mubr.bf16.gmra.mrb[0].mxu0 %v973
        %v1012 = vpop.f32.mrb[0].mxu0
        %v1013 = vadd.f32 0.0, %v1012
        %v1014 = vpop.f32.mrb[0].mxu0
        %v1015 = vpop.f32.mrb[0].mxu0
        %v1016 = vpop.f32.mrb[0].mxu0
        %1017 = vdwg.mxu0
        %v1018 = vmul.f32 %v1013, 0.5
        %v1019 = vsel %vm970, %v1018, -1e+30
        %vm1020 = vcmask 64512
        %v1021 = vsel %vm1020, %v1019, -inf
        %1022 = vmax.xlane.f32.xlu0 %v1021
        %v1023 = vpop.xlane.xlu0 %1022
        %v1024 = vsub.f32 %v1019, %v1023
        %v1025 = vmul.f32 %v1024, 1.442695
        %v1026 = vpow.pop %v1025
        %v1027 = vsel %vm1020, %v1026, 0.0
        %1028 = vadd.xlane.f32.xlu0 %v1027
        %v1029 = vpop.xlane.xlu0 %1028
        %v1030 = vrcp.pop %v1029
        %v1031 = vmul.f32 %v1026, %v1030
        %v1032 = vpack.c.bf16 %v1031, %v1031
        %1034 = vrot.lane.b32.xlu0 %v965, 64
        %v1035 = vpop.permute.xlu0 %1034
        %v1037 = vsel %vm1020, %v1032, 0
        %vm1039 = vcmask 1043456
        %v1041 = vsel %vm1039, %v1035, 0
        %1043 = vmatprep.subr.bf16.mxu0 0
        %1044 = vmatpush1.bf16.msra.mxu0 %v1041
        %1045 = vmatprep.subr.bf16.mxu0 0
        %1046 = vmatpush1.bf16.msra.mxu0 0
        %1047 = vmatprep.subr.bf16.mxu0 0
        %1048 = vmatpush1.bf16.msra.mxu0 0
        %1049 = vmatprep.subr.bf16.mxu0 0
        %1050 = vmatpush1.bf16.msra.mxu0 0
        %1051 = vmatprep.subr.bf16.mxu0 0
        %1052 = vmatpush1.bf16.msra.mxu0 0
        %1053 = vmatprep.subr.bf16.mxu0 0
        %1054 = vmatpush1.bf16.msra.mxu0 0
        %1055 = vmatprep.subr.bf16.mxu0 0
        %1056 = vmatpush1.bf16.msra.mxu0 0
        %1057 = vmatprep.subr.bf16.mxu0 0
        %1058 = vmatpush1.bf16.msra.mxu0 0
        %1059 = vmatprep.subr.bf16.mxu0 0
        %1060 = vmatpush1.bf16.msra.mxu0 0
        %1061 = vmatprep.subr.bf16.mxu0 0
        %1062 = vmatpush1.bf16.msra.mxu0 0
        %1063 = vmatprep.subr.bf16.mxu0 0
        %1064 = vmatpush1.bf16.msra.mxu0 0
        %1065 = vmatprep.subr.bf16.mxu0 0
        %1066 = vmatpush1.bf16.msra.mxu0 0
        %1067 = vmatprep.subr.bf16.mxu0 0
        %1068 = vmatpush1.bf16.msra.mxu0 0
        %1069 = vmatprep.subr.bf16.mxu0 0
        %1070 = vmatpush1.bf16.msra.mxu0 0
        %1071 = vmatprep.subr.bf16.mxu0 0
        %1072 = vmatpush1.bf16.msra.mxu0 0
        %1073 = vmatprep.subr.bf16.mxu0 0
        %1074 = vmatpush1.bf16.msra.mxu0 0
        %1075 = vmatprep.mubr.bf16.mxu0 0
        %1076 = vmatmul.mubr.bf16.gmra.mrb[0].mxu0 %v1037
        %v1077 = vpop.f32.mrb[0].mxu0
        %v1078 = vadd.f32 0.0, %v1077
        %v1079 = vpop.f32.mrb[0].mxu0
        %v1080 = vpop.f32.mrb[0].mxu0
        %v1081 = vpop.f32.mrb[0].mxu0
        %1082 = vdwg.mxu0
        %1084 = vrot.lane.b32.xlu0 %v964, 96
        %v1085 = vpop.permute.xlu0 %1084
        %v1087 = vsel %vm971, %v1085, 0
        %1089 = vmatprep.subr.bf16.mxu0 0
        %1090 = vmatpush1.bf16.xpose.msra.mxu0 %v976
        %1091 = vmatprep.subr.bf16.mxu0 0
        %1092 = vmatpush1.bf16.xpose.msra.mxu0 0
        %1093 = vmatprep.subr.bf16.mxu0 0
        %1094 = vmatpush1.bf16.xpose.msra.mxu0 0
        %1095 = vmatprep.subr.bf16.mxu0 0
        %1096 = vmatpush1.bf16.xpose.msra.mxu0 0
        %1097 = vmatprep.subr.bf16.mxu0 0
        %1098 = vmatpush1.bf16.xpose.msra.mxu0 0
        %1099 = vmatprep.subr.bf16.mxu0 0
        %1100 = vmatpush1.bf16.xpose.msra.mxu0 0
        %1101 = vmatprep.subr.bf16.mxu0 0
        %1102 = vmatpush1.bf16.xpose.msra.mxu0 0
        %1103 = vmatprep.subr.bf16.mxu0 0
        %1104 = vmatpush1.bf16.xpose.msra.mxu0 0
        %1105 = vmatprep.subr.bf16.mxu0 0
        %1106 = vmatpush1.bf16.xpose.msra.mxu0 0
        %1107 = vmatprep.subr.bf16.mxu0 0
        %1108 = vmatpush1.bf16.xpose.msra.mxu0 0
        %1109 = vmatprep.subr.bf16.mxu0 0
        %1110 = vmatpush1.bf16.xpose.msra.mxu0 0
        %1111 = vmatprep.subr.bf16.mxu0 0
        %1112 = vmatpush1.bf16.xpose.msra.mxu0 0
        %1113 = vmatprep.subr.bf16.mxu0 0
        %1114 = vmatpush1.bf16.xpose.msra.mxu0 0
        %1115 = vmatprep.subr.bf16.mxu0 0
        %1116 = vmatpush1.bf16.xpose.msra.mxu0 0
        %1117 = vmatprep.subr.bf16.mxu0 0
        %1118 = vmatpush1.bf16.xpose.msra.mxu0 0
        %1119 = vmatprep.subr.bf16.mxu0 0
        %1120 = vmatpush1.bf16.xpose.msra.mxu0 0
        %1121 = vmatprep.mubr.bf16.mxu0 0
        %1122 = vmatmul.mubr.bf16.gmra.mrb[0].mxu0 %v1087
        %v1123 = vpop.f32.mrb[0].mxu0
        %v1124 = vadd.f32 0.0, %v1123
        %v1125 = vpop.f32.mrb[0].mxu0
        %v1126 = vpop.f32.mrb[0].mxu0
        %v1127 = vpop.f32.mrb[0].mxu0
        %1128 = vdwg.mxu0
        %v1129 = vmul.f32 %v1124, 0.5
        %v1130 = vsel %vm970, %v1129, -1e+30
        %v1131 = vsel %vm1020, %v1130, -inf
        %1132 = vmax.xlane.f32.xlu0 %v1131
        %v1133 = vpop.xlane.xlu0 %1132
        %v1134 = vsub.f32 %v1130, %v1133
        %v1135 = vmul.f32 %v1134, 1.442695
        %v1136 = vpow.pop %v1135
        %v1137 = vsel %vm1020, %v1136, 0.0
        %1138 = vadd.xlane.f32.xlu0 %v1137
        %v1139 = vpop.xlane.xlu0 %1138
        %v1140 = vrcp.pop %v1139
        %v1141 = vmul.f32 %v1136, %v1140
        %v1142 = vpack.c.bf16 %v1141, %v1141
        %v1144 = vsel %vm1020, %v1142, 0
        %1146 = vmatprep.subr.bf16.mxu0 0
        %1147 = vmatpush1.bf16.msra.mxu0 %v1041
        %1148 = vmatprep.subr.bf16.mxu0 0
        %1149 = vmatpush1.bf16.msra.mxu0 0
        %1150 = vmatprep.subr.bf16.mxu0 0
        %1151 = vmatpush1.bf16.msra.mxu0 0
        %1152 = vmatprep.subr.bf16.mxu0 0
        %1153 = vmatpush1.bf16.msra.mxu0 0
        %1154 = vmatprep.subr.bf16.mxu0 0
        %1155 = vmatpush1.bf16.msra.mxu0 0
        %1156 = vmatprep.subr.bf16.mxu0 0
        %1157 = vmatpush1.bf16.msra.mxu0 0
        %1158 = vmatprep.subr.bf16.mxu0 0
        %1159 = vmatpush1.bf16.msra.mxu0 0
        %1160 = vmatprep.subr.bf16.mxu0 0
        %1161 = vmatpush1.bf16.msra.mxu0 0
        %1162 = vmatprep.subr.bf16.mxu0 0
        %1163 = vmatpush1.bf16.msra.mxu0 0
        %1164 = vmatprep.subr.bf16.mxu0 0
        %1165 = vmatpush1.bf16.msra.mxu0 0
        %1166 = vmatprep.subr.bf16.mxu0 0
        %1167 = vmatpush1.bf16.msra.mxu0 0
        %1168 = vmatprep.subr.bf16.mxu0 0
        %1169 = vmatpush1.bf16.msra.mxu0 0
        %1170 = vmatprep.subr.bf16.mxu0 0
        %1171 = vmatpush1.bf16.msra.mxu0 0
        %1172 = vmatprep.subr.bf16.mxu0 0
        %1173 = vmatpush1.bf16.msra.mxu0 0
        %1174 = vmatprep.subr.bf16.mxu0 0
        %1175 = vmatpush1.bf16.msra.mxu0 0
        %1176 = vmatprep.subr.bf16.mxu0 0
        %1177 = vmatpush1.bf16.msra.mxu0 0
        %1178 = vmatprep.mubr.bf16.mxu0 0
        %1179 = vmatmul.mubr.bf16.gmra.mrb[0].mxu0 %v1144
        %v1180 = vpop.f32.mrb[0].mxu0
        %v1181 = vadd.f32 0.0, %v1180
        %v1182 = vpop.f32.mrb[0].mxu0
        %v1183 = vpop.f32.mrb[0].mxu0
        %v1184 = vpop.f32.mrb[0].mxu0
        %1185 = vdwg.mxu0
        %1186 = vrot.lane.b32.xlu0 %v964, 64
        %v1187 = vpop.permute.xlu0 %1186
        %1188 = vrot.lane.b32.xlu0 %v965, 96
        %v1189 = vpop.permute.xlu0 %1188
        %v1191 = vsel %vm971, %v1187, 0
        %v1194 = vsel %vm971, %v1189, 0
        %1196 = vmatprep.subr.bf16.mxu0 0
        %1197 = vmatpush1.bf16.xpose.msra.mxu0 %v1194
        %1198 = vmatprep.subr.bf16.mxu0 0
        %1199 = vmatpush1.bf16.xpose.msra.mxu0 0
        %1200 = vmatprep.subr.bf16.mxu0 0
        %1201 = vmatpush1.bf16.xpose.msra.mxu0 0
        %1202 = vmatprep.subr.bf16.mxu0 0
        %1203 = vmatpush1.bf16.xpose.msra.mxu0 0
        %1204 = vmatprep.subr.bf16.mxu0 0
        %1205 = vmatpush1.bf16.xpose.msra.mxu0 0
        %1206 = vmatprep.subr.bf16.mxu0 0
        %1207 = vmatpush1.bf16.xpose.msra.mxu0 0
        %1208 = vmatprep.subr.bf16.mxu0 0
        %1209 = vmatpush1.bf16.xpose.msra.mxu0 0
        %1210 = vmatprep.subr.bf16.mxu0 0
        %1211 = vmatpush1.bf16.xpose.msra.mxu0 0
        %1212 = vmatprep.subr.bf16.mxu0 0
        %1213 = vmatpush1.bf16.xpose.msra.mxu0 0
        %1214 = vmatprep.subr.bf16.mxu0 0
        %1215 = vmatpush1.bf16.xpose.msra.mxu0 0
        %1216 = vmatprep.subr.bf16.mxu0 0
        %1217 = vmatpush1.bf16.xpose.msra.mxu0 0
        %1218 = vmatprep.subr.bf16.mxu0 0
        %1219 = vmatpush1.bf16.xpose.msra.mxu0 0
        %1220 = vmatprep.subr.bf16.mxu0 0
        %1221 = vmatpush1.bf16.xpose.msra.mxu0 0
        %1222 = vmatprep.subr.bf16.mxu0 0
        %1223 = vmatpush1.bf16.xpose.msra.mxu0 0
        %1224 = vmatprep.subr.bf16.mxu0 0
        %1225 = vmatpush1.bf16.xpose.msra.mxu0 0
        %1226 = vmatprep.subr.bf16.mxu0 0
        %1227 = vmatpush1.bf16.xpose.msra.mxu0 0
        %1228 = vmatprep.mubr.bf16.mxu0 0
        %1229 = vmatmul.mubr.bf16.gmra.mrb[0].mxu0 %v1191
        %v1230 = vpop.f32.mrb[0].mxu0
        %v1231 = vadd.f32 0.0, %v1230
        %v1232 = vpop.f32.mrb[0].mxu0
        %v1233 = vpop.f32.mrb[0].mxu0
        %v1234 = vpop.f32.mrb[0].mxu0
        %1235 = vdwg.mxu0
        %v1236 = vmul.f32 %v1231, 0.5
        %v1237 = vsel %vm970, %v1236, -1e+30
        %v1238 = vsel %vm1020, %v1237, -inf
        %1239 = vmax.xlane.f32.xlu0 %v1238
        %v1240 = vpop.xlane.xlu0 %1239
        %v1241 = vsub.f32 %v1237, %v1240
        %v1242 = vmul.f32 %v1241, 1.442695
        %v1243 = vpow.pop %v1242
        %v1244 = vsel %vm1020, %v1243, 0.0
        %1245 = vadd.xlane.f32.xlu0 %v1244
        %v1246 = vpop.xlane.xlu0 %1245
        %v1247 = vrcp.pop %v1246
        %v1248 = vmul.f32 %v1243, %v1247
        %v1249 = vpack.c.bf16 %v1248, %v1248
        %1250 = vrot.lane.b32.xlu0 %v965, 32
        %v1251 = vpop.permute.xlu0 %1250
        %v1253 = vsel %vm1020, %v1249, 0
        %v1256 = vsel %vm1039, %v1251, 0
        %1258 = vmatprep.subr.bf16.mxu0 0
        %1259 = vmatpush1.bf16.msra.mxu0 %v1256
        %1260 = vmatprep.subr.bf16.mxu0 0
        %1261 = vmatpush1.bf16.msra.mxu0 0
        %1262 = vmatprep.subr.bf16.mxu0 0
        %1263 = vmatpush1.bf16.msra.mxu0 0
        %1264 = vmatprep.subr.bf16.mxu0 0
        %1265 = vmatpush1.bf16.msra.mxu0 0
        %1266 = vmatprep.subr.bf16.mxu0 0
        %1267 = vmatpush1.bf16.msra.mxu0 0
        %1268 = vmatprep.subr.bf16.mxu0 0
        %1269 = vmatpush1.bf16.msra.mxu0 0
        %1270 = vmatprep.subr.bf16.mxu0 0
        %1271 = vmatpush1.bf16.msra.mxu0 0
        %1272 = vmatprep.subr.bf16.mxu0 0
        %1273 = vmatpush1.bf16.msra.mxu0 0
        %1274 = vmatprep.subr.bf16.mxu0 0
        %1275 = vmatpush1.bf16.msra.mxu0 0
        %1276 = vmatprep.subr.bf16.mxu0 0
        %1277 = vmatpush1.bf16.msra.mxu0 0
        %1278 = vmatprep.subr.bf16.mxu0 0
        %1279 = vmatpush1.bf16.msra.mxu0 0
        %1280 = vmatprep.subr.bf16.mxu0 0
        %1281 = vmatpush1.bf16.msra.mxu0 0
        %1282 = vmatprep.subr.bf16.mxu0 0
        %1283 = vmatpush1.bf16.msra.mxu0 0
        %1284 = vmatprep.subr.bf16.mxu0 0
        %1285 = vmatpush1.bf16.msra.mxu0 0
        %1286 = vmatprep.subr.bf16.mxu0 0
        %1287 = vmatpush1.bf16.msra.mxu0 0
        %1288 = vmatprep.subr.bf16.mxu0 0
        %1289 = vmatpush1.bf16.msra.mxu0 0
        %1290 = vmatprep.mubr.bf16.mxu0 0
        %1291 = vmatmul.mubr.bf16.gmra.mrb[0].mxu0 %v1253
        %v1292 = vpop.f32.mrb[0].mxu0
        %v1293 = vadd.f32 0.0, %v1292
        %v1294 = vpop.f32.mrb[0].mxu0
        %v1295 = vpop.f32.mrb[0].mxu0
        %v1296 = vpop.f32.mrb[0].mxu0
        %1297 = vdwg.mxu0
        %1298 = vrot.lane.b32.xlu0 %v964, 32
        %v1299 = vpop.permute.xlu0 %1298
        %v1301 = vsel %vm971, %v1299, 0
        %1303 = vmatprep.subr.bf16.mxu0 0
        %1304 = vmatpush1.bf16.xpose.msra.mxu0 %v1194
        %1305 = vmatprep.subr.bf16.mxu0 0
        %1306 = vmatpush1.bf16.xpose.msra.mxu0 0
        %1307 = vmatprep.subr.bf16.mxu0 0
        %1308 = vmatpush1.bf16.xpose.msra.mxu0 0
        %1309 = vmatprep.subr.bf16.mxu0 0
        %1310 = vmatpush1.bf16.xpose.msra.mxu0 0
        %1311 = vmatprep.subr.bf16.mxu0 0
        %1312 = vmatpush1.bf16.xpose.msra.mxu0 0
        %1313 = vmatprep.subr.bf16.mxu0 0
        %1314 = vmatpush1.bf16.xpose.msra.mxu0 0
        %1315 = vmatprep.subr.bf16.mxu0 0
        %1316 = vmatpush1.bf16.xpose.msra.mxu0 0
        %1317 = vmatprep.subr.bf16.mxu0 0
        %1318 = vmatpush1.bf16.xpose.msra.mxu0 0
        %1319 = vmatprep.subr.bf16.mxu0 0
        %1320 = vmatpush1.bf16.xpose.msra.mxu0 0
        %1321 = vmatprep.subr.bf16.mxu0 0
        %1322 = vmatpush1.bf16.xpose.msra.mxu0 0
        %1323 = vmatprep.subr.bf16.mxu0 0
        %1324 = vmatpush1.bf16.xpose.msra.mxu0 0
        %1325 = vmatprep.subr.bf16.mxu0 0
        %1326 = vmatpush1.bf16.xpose.msra.mxu0 0
        %1327 = vmatprep.subr.bf16.mxu0 0
        %1328 = vmatpush1.bf16.xpose.msra.mxu0 0
        %1329 = vmatprep.subr.bf16.mxu0 0
        %1330 = vmatpush1.bf16.xpose.msra.mxu0 0
        %1331 = vmatprep.subr.bf16.mxu0 0
        %1332 = vmatpush1.bf16.xpose.msra.mxu0 0
        %1333 = vmatprep.subr.bf16.mxu0 0
        %1334 = vmatpush1.bf16.xpose.msra.mxu0 0
        %1335 = vmatprep.mubr.bf16.mxu0 0
        %1336 = vmatmul.mubr.bf16.gmra.mrb[0].mxu0 %v1301
        %v1337 = vpop.f32.mrb[0].mxu0
        %v1338 = vadd.f32 0.0, %v1337
        %v1339 = vpop.f32.mrb[0].mxu0
        %v1340 = vpop.f32.mrb[0].mxu0
        %v1341 = vpop.f32.mrb[0].mxu0
        %1342 = vdwg.mxu0
        %v1343 = vmul.f32 %v1338, 0.5
        %v1344 = vsel %vm970, %v1343, -1e+30
        %v1345 = vsel %vm1020, %v1344, -inf
        %1346 = vmax.xlane.f32.xlu0 %v1345
        %v1347 = vpop.xlane.xlu0 %1346
        %v1348 = vsub.f32 %v1344, %v1347
        %v1349 = vmul.f32 %v1348, 1.442695
        %v1350 = vpow.pop %v1349
        %v1351 = vsel %vm1020, %v1350, 0.0
        %1352 = vadd.xlane.f32.xlu0 %v1351
        %v1353 = vpop.xlane.xlu0 %1352
        %v1354 = vrcp.pop %v1353
        %v1355 = vmul.f32 %v1350, %v1354
        %v1356 = vpack.c.bf16 %v1355, %v1355
        %v1358 = vsel %vm1020, %v1356, 0
        %1360 = vmatprep.subr.bf16.mxu0 0
        %1361 = vmatpush1.bf16.msra.mxu0 %v1256
        %1362 = vmatprep.subr.bf16.mxu0 0
        %1363 = vmatpush1.bf16.msra.mxu0 0
        %1364 = vmatprep.subr.bf16.mxu0 0
        %1365 = vmatpush1.bf16.msra.mxu0 0
        %1366 = vmatprep.subr.bf16.mxu0 0
        %1367 = vmatpush1.bf16.msra.mxu0 0
        %1368 = vmatprep.subr.bf16.mxu0 0
        %1369 = vmatpush1.bf16.msra.mxu0 0
        %1370 = vmatprep.subr.bf16.mxu0 0
        %1371 = vmatpush1.bf16.msra.mxu0 0
        %1372 = vmatprep.subr.bf16.mxu0 0
        %1373 = vmatpush1.bf16.msra.mxu0 0
        %1374 = vmatprep.subr.bf16.mxu0 0
        %1375 = vmatpush1.bf16.msra.mxu0 0
        %1376 = vmatprep.subr.bf16.mxu0 0
        %1377 = vmatpush1.bf16.msra.mxu0 0
        %1378 = vmatprep.subr.bf16.mxu0 0
        %1379 = vmatpush1.bf16.msra.mxu0 0
        %1380 = vmatprep.subr.bf16.mxu0 0
        %1381 = vmatpush1.bf16.msra.mxu0 0
        %1382 = vmatprep.subr.bf16.mxu0 0
        %1383 = vmatpush1.bf16.msra.mxu0 0
        %1384 = vmatprep.subr.bf16.mxu0 0
        %1385 = vmatpush1.bf16.msra.mxu0 0
        %1386 = vmatprep.subr.bf16.mxu0 0
        %1387 = vmatpush1.bf16.msra.mxu0 0
        %1388 = vmatprep.subr.bf16.mxu0 0
        %1389 = vmatpush1.bf16.msra.mxu0 0
        %1390 = vmatprep.subr.bf16.mxu0 0
        %1391 = vmatpush1.bf16.msra.mxu0 0
        %1392 = vmatprep.mubr.bf16.mxu0 0
        %1393 = vmatmul.mubr.bf16.gmra.mrb[0].mxu0 %v1358
        %v1394 = vpop.f32.mrb[0].mxu0
        %v1395 = vadd.f32 0.0, %v1394
        %v1396 = vpop.f32.mrb[0].mxu0
        %v1397 = vpop.f32.mrb[0].mxu0
        %v1398 = vpop.f32.mrb[0].mxu0
        %1399 = vdwg.mxu0
        %1401 = vrot.lane.b32.xlu0 %v1181, 32
        %v1402 = vpop.permute.xlu0 %1401
        %1405 = vrot.lane.b32.xlu0 %v1293, 64
        %v1406 = vpop.permute.xlu0 %1405
        %1409 = vrot.lane.b32.xlu0 %v1395, 96
        %v1410 = vpop.permute.xlu0 %1409
        %v1412 = vsel %vm971, %v1078, %v1402
        %vm1413 = vcmask 523264
        %v1414 = vsel %vm1413, %v1412, %v1406
        %vm1415 = vcmask 785408
        %v1416 = vsel %vm1415, %v1414, %v1410
        %v1417 = vpack.c.bf16 %v1416, %v1416
        %v1418 = vld [vmem:[#allocation14] sm:$0xf]
        %v1419 = vld [vmem:[#allocation14 + $0x4] sm:$0xf]
        %v1420 = vld [vmem:[#allocation14 + $0x8] sm:$0xf]
        %v1421 = vld [vmem:[#allocation14 + $0xc] sm:$0xf]
        %v1422 = vld [vmem:[#allocation14 + $0x10] sm:$0xf]
        %v1423 = vld [vmem:[#allocation14 + $0x14] sm:$0xf]
        %v1424 = vld [vmem:[#allocation14 + $0x18] sm:$0xf]
        %v1425 = vld [vmem:[#allocation14 + $0x1c] sm:$0xf]
        %v1426 = vld [vmem:[#allocation14 + $0x20] sm:$0xf]
        %v1427 = vld [vmem:[#allocation14 + $0x24] sm:$0xf]
        %v1428 = vld [vmem:[#allocation14 + $0x28] sm:$0xf]
        %v1429 = vld [vmem:[#allocation14 + $0x2c] sm:$0xf]
        %v1430 = vld [vmem:[#allocation14 + $0x30] sm:$0xf]
        %v1431 = vld [vmem:[#allocation14 + $0x34] sm:$0xf]
        %v1432 = vld [vmem:[#allocation14 + $0x38] sm:$0xf]
        %v1433 = vld [vmem:[#allocation14 + $0x3c] sm:$0xf]
        %v1450 = vunpack.c.l.b16 %v1418
        %v1451 = vunpack.c.l.b16 %v1419
        %v1452 = vunpack.c.l.b16 %v1420
        %v1453 = vunpack.c.l.b16 %v1421
        %v1454 = vunpack.c.l.b16 %v1422
        %v1455 = vunpack.c.l.b16 %v1423
        %v1456 = vunpack.c.l.b16 %v1424
        %v1457 = vunpack.c.l.b16 %v1425
        %v1458 = vunpack.c.l.b16 %v1426
        %v1459 = vunpack.c.l.b16 %v1427
        %v1460 = vunpack.c.l.b16 %v1428
        %v1461 = vunpack.c.l.b16 %v1429
        %v1462 = vunpack.c.l.b16 %v1430
        %v1463 = vunpack.c.l.b16 %v1431
        %v1464 = vunpack.c.l.b16 %v1432
        %v1465 = vunpack.c.l.b16 %v1433
        %v1466 = vpack.c.b16 %v1451, %v1450
        %v1467 = vpack.c.b16 %v1453, %v1452
        %v1468 = vpack.c.b16 %v1455, %v1454
        %v1469 = vpack.c.b16 %v1457, %v1456
        %v1470 = vpack.c.b16 %v1459, %v1458
        %v1471 = vpack.c.b16 %v1461, %v1460
        %v1472 = vpack.c.b16 %v1463, %v1462
        %v1473 = vpack.c.b16 %v1465, %v1464
        %1482 = vmatprep.subr.bf16.mxu0 0
        %1483 = vmatpush1.bf16.msra.mxu0 %v1466
        %1484 = vmatprep.subr.bf16.mxu0 0
        %1485 = vmatpush1.bf16.msra.mxu0 %v1467
        %1486 = vmatprep.subr.bf16.mxu0 0
        %1487 = vmatpush1.bf16.msra.mxu0 %v1468
        %1488 = vmatprep.subr.bf16.mxu0 0
        %1489 = vmatpush1.bf16.msra.mxu0 %v1469
        %1490 = vmatprep.subr.bf16.mxu0 0
        %1491 = vmatpush1.bf16.msra.mxu0 %v1470
        %1492 = vmatprep.subr.bf16.mxu0 0
        %1493 = vmatpush1.bf16.msra.mxu0 %v1471
        %1494 = vmatprep.subr.bf16.mxu0 0
        %1495 = vmatpush1.bf16.msra.mxu0 %v1472
        %1496 = vmatprep.subr.bf16.mxu0 0
        %1497 = vmatpush1.bf16.msra.mxu0 %v1473
        %1498 = vmatprep.subr.bf16.mxu0 0
        %1499 = vmatpush1.bf16.msra.mxu0 0
        %1500 = vmatprep.subr.bf16.mxu0 0
        %1501 = vmatpush1.bf16.msra.mxu0 0
        %1502 = vmatprep.subr.bf16.mxu0 0
        %1503 = vmatpush1.bf16.msra.mxu0 0
        %1504 = vmatprep.subr.bf16.mxu0 0
        %1505 = vmatpush1.bf16.msra.mxu0 0
        %1506 = vmatprep.subr.bf16.mxu0 0
        %1507 = vmatpush1.bf16.msra.mxu0 0
        %1508 = vmatprep.subr.bf16.mxu0 0
        %1509 = vmatpush1.bf16.msra.mxu0 0
        %1510 = vmatprep.subr.bf16.mxu0 0
        %1511 = vmatpush1.bf16.msra.mxu0 0
        %1512 = vmatprep.subr.bf16.mxu0 0
        %1513 = vmatpush1.bf16.msra.mxu0 0
        %1514 = vmatprep.mubr.bf16.mxu0 0
        %1515 = vmatmul.mubr.bf16.gmra.mrb[0].mxu0 %v1417
        %v1516 = vpop.f32.mrb[0].mxu0
        %v1517 = vadd.f32 0.0, %v1516
        %v1518 = vpop.f32.mrb[0].mxu0
        %v1519 = vpop.f32.mrb[0].mxu0
        %v1520 = vpop.f32.mrb[0].mxu0
        %1521 = vdwg.mxu0
        %v1522 = vmul.f32 %v1517, 0.7
        %v1523 = vadd.f32 %v582, %v1522
        %v1524 = vld [vmem:[%s12] sm:$0x1]
        %v1525 = vmul.f32 %v1523, %v1523
        %1526 = vadd.xlane.f32.xlu0 %v1525
        %v1527 = vpop.xlane.xlu0 %1526
        %v1528 = vmul.f32 %v1527, %v603
        %v1529 = vadd.f32 %v1528, 1e-06
        %v1530 = vrsqrt.pop %v1529
        %v1531 = vmul.f32 %v1523, %v1530
        %v1533 = vlaneseq
        %v1534 = vshrl.u32 %v1533, 7
        %v1535 = vsub.s32 0, %v1534
        %v1536 = vrot.slane %v1524, %v1535
        %v1538 = vmul.f32 %v1531, %v1536
        %v1539 = vpack.c.bf16 %v1538, %v1538
        %v1540 = vld [vmem:[#allocation16] sm:$0xff]
        %v1541 = vld [vmem:[#allocation16 + $0x8] sm:$0xff]
        %v1542 = vld [vmem:[#allocation16 + $0x10] sm:$0xff]
        %v1543 = vld [vmem:[#allocation16 + $0x18] sm:$0xff]
        %v1544 = vld [vmem:[#allocation16 + $0x20] sm:$0xff]
        %v1545 = vld [vmem:[#allocation16 + $0x28] sm:$0xff]
        %v1546 = vld [vmem:[#allocation16 + $0x30] sm:$0xff]
        %v1547 = vld [vmem:[#allocation16 + $0x38] sm:$0xff]
        %v1548 = vld [vmem:[#allocation16 + $0x40] sm:$0xff]
        %v1549 = vld [vmem:[#allocation16 + $0x48] sm:$0xff]
        %v1550 = vld [vmem:[#allocation16 + $0x50] sm:$0xff]
        %v1551 = vld [vmem:[#allocation16 + $0x58] sm:$0xff]
        %v1552 = vld [vmem:[#allocation16 + $0x60] sm:$0xff]
        %v1553 = vld [vmem:[#allocation16 + $0x68] sm:$0xff]
        %v1554 = vld [vmem:[#allocation16 + $0x70] sm:$0xff]
        %v1555 = vld [vmem:[#allocation16 + $0x78] sm:$0xff]
        %v1556 = vld [vmem:[#allocation16 + $0x80] sm:$0xff]
        %v1557 = vld [vmem:[#allocation16 + $0x88] sm:$0xff]
        %v1558 = vld [vmem:[#allocation16 + $0x90] sm:$0xff]
        %v1559 = vld [vmem:[#allocation16 + $0x98] sm:$0xff]
        %v1560 = vld [vmem:[#allocation16 + $0xa0] sm:$0xff]
        %v1561 = vld [vmem:[#allocation16 + $0xa8] sm:$0xff]
        %v1562 = vld [vmem:[#allocation16 + $0xb0] sm:$0xff]
        %v1563 = vld [vmem:[#allocation16 + $0xb8] sm:$0xff]
        %v1564 = vld [vmem:[#allocation16 + $0xc0] sm:$0xff]
        %v1565 = vld [vmem:[#allocation16 + $0xc8] sm:$0xff]
        %v1566 = vld [vmem:[#allocation16 + $0xd0] sm:$0xff]
        %v1567 = vld [vmem:[#allocation16 + $0xd8] sm:$0xff]
        %v1568 = vld [vmem:[#allocation16 + $0xe0] sm:$0xff]
        %v1569 = vld [vmem:[#allocation16 + $0xe8] sm:$0xff]
        %v1570 = vld [vmem:[#allocation16 + $0xf0] sm:$0xff]
        %v1571 = vld [vmem:[#allocation16 + $0xf8] sm:$0xff]
        %v1604 = vunpack.c.l.b16 %v1540
        %v1605 = vunpack.c.h.b16 %v1540
        %v1606 = vunpack.c.l.b16 %v1541
        %v1607 = vunpack.c.h.b16 %v1541
        %v1608 = vunpack.c.l.b16 %v1542
        %v1609 = vunpack.c.h.b16 %v1542
        %v1610 = vunpack.c.l.b16 %v1543
        %v1611 = vunpack.c.h.b16 %v1543
        %v1612 = vunpack.c.l.b16 %v1544
        %v1613 = vunpack.c.h.b16 %v1544
        %v1614 = vunpack.c.l.b16 %v1545
        %v1615 = vunpack.c.h.b16 %v1545
        %v1616 = vunpack.c.l.b16 %v1546
        %v1617 = vunpack.c.h.b16 %v1546
        %v1618 = vunpack.c.l.b16 %v1547
        %v1619 = vunpack.c.h.b16 %v1547
        %v1620 = vunpack.c.l.b16 %v1548
        %v1621 = vunpack.c.h.b16 %v1548
        %v1622 = vunpack.c.l.b16 %v1549
        %v1623 = vunpack.c.h.b16 %v1549
        %v1624 = vunpack.c.l.b16 %v1550
        %v1625 = vunpack.c.h.b16 %v1550
        %v1626 = vunpack.c.l.b16 %v1551
        %v1627 = vunpack.c.h.b16 %v1551
        %v1628 = vunpack.c.l.b16 %v1552
        %v1629 = vunpack.c.h.b16 %v1552
        %v1630 = vunpack.c.l.b16 %v1553
        %v1631 = vunpack.c.h.b16 %v1553
        %v1632 = vunpack.c.l.b16 %v1554
        %v1633 = vunpack.c.h.b16 %v1554
        %v1634 = vunpack.c.l.b16 %v1555
        %v1635 = vunpack.c.h.b16 %v1555
        %v1636 = vunpack.c.l.b16 %v1556
        %v1637 = vunpack.c.h.b16 %v1556
        %v1638 = vunpack.c.l.b16 %v1557
        %v1639 = vunpack.c.h.b16 %v1557
        %v1640 = vunpack.c.l.b16 %v1558
        %v1641 = vunpack.c.h.b16 %v1558
        %v1642 = vunpack.c.l.b16 %v1559
        %v1643 = vunpack.c.h.b16 %v1559
        %v1644 = vunpack.c.l.b16 %v1560
        %v1645 = vunpack.c.h.b16 %v1560
        %v1646 = vunpack.c.l.b16 %v1561
        %v1647 = vunpack.c.h.b16 %v1561
        %v1648 = vunpack.c.l.b16 %v1562
        %v1649 = vunpack.c.h.b16 %v1562
        %v1650 = vunpack.c.l.b16 %v1563
        %v1651 = vunpack.c.h.b16 %v1563
        %v1652 = vunpack.c.l.b16 %v1564
        %v1653 = vunpack.c.h.b16 %v1564
        %v1654 = vunpack.c.l.b16 %v1565
        %v1655 = vunpack.c.h.b16 %v1565
        %v1656 = vunpack.c.l.b16 %v1566
        %v1657 = vunpack.c.h.b16 %v1566
        %v1658 = vunpack.c.l.b16 %v1567
        %v1659 = vunpack.c.h.b16 %v1567
        %v1660 = vunpack.c.l.b16 %v1568
        %v1661 = vunpack.c.h.b16 %v1568
        %v1662 = vunpack.c.l.b16 %v1569
        %v1663 = vunpack.c.h.b16 %v1569
        %v1664 = vunpack.c.l.b16 %v1570
        %v1665 = vunpack.c.h.b16 %v1570
        %v1666 = vunpack.c.l.b16 %v1571
        %v1667 = vunpack.c.h.b16 %v1571
        %v1668 = vpack.c.b16 %v1608, %v1604
        %v1669 = vpack.c.b16 %v1609, %v1605
        %v1670 = vpack.c.b16 %v1610, %v1606
        %v1671 = vpack.c.b16 %v1611, %v1607
        %v1672 = vpack.c.b16 %v1616, %v1612
        %v1673 = vpack.c.b16 %v1617, %v1613
        %v1674 = vpack.c.b16 %v1618, %v1614
        %v1675 = vpack.c.b16 %v1619, %v1615
        %v1676 = vpack.c.b16 %v1624, %v1620
        %v1677 = vpack.c.b16 %v1625, %v1621
        %v1678 = vpack.c.b16 %v1626, %v1622
        %v1679 = vpack.c.b16 %v1627, %v1623
        %v1680 = vpack.c.b16 %v1632, %v1628
        %v1681 = vpack.c.b16 %v1633, %v1629
        %v1682 = vpack.c.b16 %v1634, %v1630
        %v1683 = vpack.c.b16 %v1635, %v1631
        %v1684 = vpack.c.b16 %v1640, %v1636
        %v1685 = vpack.c.b16 %v1641, %v1637
        %v1686 = vpack.c.b16 %v1642, %v1638
        %v1687 = vpack.c.b16 %v1643, %v1639
        %v1688 = vpack.c.b16 %v1648, %v1644
        %v1689 = vpack.c.b16 %v1649, %v1645
        %v1690 = vpack.c.b16 %v1650, %v1646
        %v1691 = vpack.c.b16 %v1651, %v1647
        %v1692 = vpack.c.b16 %v1656, %v1652
        %v1693 = vpack.c.b16 %v1657, %v1653
        %v1694 = vpack.c.b16 %v1658, %v1654
        %v1695 = vpack.c.b16 %v1659, %v1655
        %v1696 = vpack.c.b16 %v1664, %v1660
        %v1697 = vpack.c.b16 %v1665, %v1661
        %v1698 = vpack.c.b16 %v1666, %v1662
        %v1699 = vpack.c.b16 %v1667, %v1663
        %1732 = vmatprep.subr.bf16.mxu0 %v1669
        %1733 = vmatpush1.bf16.msra.mxu0 %v1668
        %1734 = vmatprep.subr.bf16.mxu0 %v1673
        %1735 = vmatpush1.bf16.msra.mxu0 %v1672
        %1736 = vmatprep.subr.bf16.mxu0 %v1677
        %1737 = vmatpush1.bf16.msra.mxu0 %v1676
        %1738 = vmatprep.subr.bf16.mxu0 %v1681
        %1739 = vmatpush1.bf16.msra.mxu0 %v1680
        %1740 = vmatprep.subr.bf16.mxu0 %v1685
        %1741 = vmatpush1.bf16.msra.mxu0 %v1684
        %1742 = vmatprep.subr.bf16.mxu0 %v1689
        %1743 = vmatpush1.bf16.msra.mxu0 %v1688
        %1744 = vmatprep.subr.bf16.mxu0 %v1693
        %1745 = vmatpush1.bf16.msra.mxu0 %v1692
        %1746 = vmatprep.subr.bf16.mxu0 %v1697
        %1747 = vmatpush1.bf16.msra.mxu0 %v1696
        %1748 = vmatprep.subr.bf16.mxu0 0
        %1749 = vmatpush1.bf16.msra.mxu0 0
        %1750 = vmatprep.subr.bf16.mxu0 0
        %1751 = vmatpush1.bf16.msra.mxu0 0
        %1752 = vmatprep.subr.bf16.mxu0 0
        %1753 = vmatpush1.bf16.msra.mxu0 0
        %1754 = vmatprep.subr.bf16.mxu0 0
        %1755 = vmatpush1.bf16.msra.mxu0 0
        %1756 = vmatprep.subr.bf16.mxu0 0
        %1757 = vmatpush1.bf16.msra.mxu0 0
        %1758 = vmatprep.subr.bf16.mxu0 0
        %1759 = vmatpush1.bf16.msra.mxu0 0
        %1760 = vmatprep.subr.bf16.mxu0 0
        %1761 = vmatpush1.bf16.msra.mxu0 0
        %1762 = vmatprep.subr.bf16.mxu0 0
        %1763 = vmatpush1.bf16.msra.mxu0 0
        %1764 = vmatprep.mubr.bf16.mxu0 0
        %1765 = vmatmul.mubr.bf16.gmra.mrb[0].mxu0 %v1539
        %v1766 = vpop.f32.mrb[0].mxu0
        %v1767 = vadd.f32 0.0, %v1766
        %v1768 = vpop.f32.mrb[0].mxu0
        %v1769 = vadd.f32 0.0, %v1768
        %v1770 = vpop.f32.mrb[0].mxu0
        %v1771 = vpop.f32.mrb[0].mxu0
        %1772 = vdwg.mxu0
        %1773 = vmatprep.subr.bf16.mxu0 %v1671
        %1774 = vmatpush1.bf16.msra.mxu0 %v1670
        %1775 = vmatprep.subr.bf16.mxu0 %v1675
        %1776 = vmatpush1.bf16.msra.mxu0 %v1674
        %1777 = vmatprep.subr.bf16.mxu0 %v1679
        %1778 = vmatpush1.bf16.msra.mxu0 %v1678
        %1779 = vmatprep.subr.bf16.mxu0 %v1683
        %1780 = vmatpush1.bf16.msra.mxu0 %v1682
        %1781 = vmatprep.subr.bf16.mxu0 %v1687
        %1782 = vmatpush1.bf16.msra.mxu0 %v1686
        %1783 = vmatprep.subr.bf16.mxu0 %v1691
        %1784 = vmatpush1.bf16.msra.mxu0 %v1690
        %1785 = vmatprep.subr.bf16.mxu0 %v1695
        %1786 = vmatpush1.bf16.msra.mxu0 %v1694
        %1787 = vmatprep.subr.bf16.mxu0 %v1699
        %1788 = vmatpush1.bf16.msra.mxu0 %v1698
        %1789 = vmatprep.subr.bf16.mxu0 0
        %1790 = vmatpush1.bf16.msra.mxu0 0
        %1791 = vmatprep.subr.bf16.mxu0 0
        %1792 = vmatpush1.bf16.msra.mxu0 0
        %1793 = vmatprep.subr.bf16.mxu0 0
        %1794 = vmatpush1.bf16.msra.mxu0 0
        %1795 = vmatprep.subr.bf16.mxu0 0
        %1796 = vmatpush1.bf16.msra.mxu0 0
        %1797 = vmatprep.subr.bf16.mxu0 0
        %1798 = vmatpush1.bf16.msra.mxu0 0
        %1799 = vmatprep.subr.bf16.mxu0 0
        %1800 = vmatpush1.bf16.msra.mxu0 0
        %1801 = vmatprep.subr.bf16.mxu0 0
        %1802 = vmatpush1.bf16.msra.mxu0 0
        %1803 = vmatprep.subr.bf16.mxu0 0
        %1804 = vmatpush1.bf16.msra.mxu0 0
        %1805 = vmatprep.mubr.bf16.mxu0 0
        %1806 = vmatmul.mubr.bf16.gmra.mrb[0].mxu0 %v1539
        %v1807 = vpop.f32.mrb[0].mxu0
        %v1808 = vadd.f32 0.0, %v1807
        %v1809 = vpop.f32.mrb[0].mxu0
        %v1810 = vadd.f32 0.0, %v1809
        %v1811 = vpop.f32.mrb[0].mxu0
        %v1812 = vpop.f32.mrb[0].mxu0
        %1813 = vdwg.mxu0
        %v1814 = vxor.u32 %v1767, 2147483648
        %v1815 = vxor.u32 %v1769, 2147483648
        %v1816 = vmul.f32 %v1814, 1.442695
        %v1817 = vpow.pop %v1816
        %v1818 = vmul.f32 %v1815, 1.442695
        %v1819 = vpow.pop %v1818
        %v1820 = vadd.f32 %v1817, 1.0
        %v1821 = vadd.f32 %v1819, 1.0
        %v1822 = vrcp.pop %v1820
        %v1823 = vmul.f32 1.0, %v1822
        %v1824 = vrcp.pop %v1821
        %v1825 = vmul.f32 1.0, %v1824
        %v1826 = vmul.f32 %v1767, %v1823
        %v1827 = vmul.f32 %v1769, %v1825
        %v1828 = vmul.f32 %v1826, %v1808
        %v1829 = vmul.f32 %v1827, %v1810
        %v1830 = vpack.c.bf16 %v1828, %v1828
        %v1831 = vpack.c.bf16 %v1829, %v1829
        %v1832 = vld [vmem:[#allocation17] sm:$0xf]
        %v1833 = vld [vmem:[#allocation17 + $0x4] sm:$0xf]
        %v1834 = vld [vmem:[#allocation17 + $0x8] sm:$0xf]
        %v1835 = vld [vmem:[#allocation17 + $0xc] sm:$0xf]
        %v1836 = vld [vmem:[#allocation17 + $0x10] sm:$0xf]
        %v1837 = vld [vmem:[#allocation17 + $0x14] sm:$0xf]
        %v1838 = vld [vmem:[#allocation17 + $0x18] sm:$0xf]
        %v1839 = vld [vmem:[#allocation17 + $0x1c] sm:$0xf]
        %v1840 = vld [vmem:[#allocation17 + $0x20] sm:$0xf]
        %v1841 = vld [vmem:[#allocation17 + $0x24] sm:$0xf]
        %v1842 = vld [vmem:[#allocation17 + $0x28] sm:$0xf]
        %v1843 = vld [vmem:[#allocation17 + $0x2c] sm:$0xf]
        %v1844 = vld [vmem:[#allocation17 + $0x30] sm:$0xf]
        %v1845 = vld [vmem:[#allocation17 + $0x34] sm:$0xf]
        %v1846 = vld [vmem:[#allocation17 + $0x38] sm:$0xf]
        %v1847 = vld [vmem:[#allocation17 + $0x3c] sm:$0xf]
        %v1848 = vld [vmem:[#allocation17 + $0x40] sm:$0xf]
        %v1849 = vld [vmem:[#allocation17 + $0x44] sm:$0xf]
        %v1850 = vld [vmem:[#allocation17 + $0x48] sm:$0xf]
        %v1851 = vld [vmem:[#allocation17 + $0x4c] sm:$0xf]
        %v1852 = vld [vmem:[#allocation17 + $0x50] sm:$0xf]
        %v1853 = vld [vmem:[#allocation17 + $0x54] sm:$0xf]
        %v1854 = vld [vmem:[#allocation17 + $0x58] sm:$0xf]
        %v1855 = vld [vmem:[#allocation17 + $0x5c] sm:$0xf]
        %v1856 = vld [vmem:[#allocation17 + $0x60] sm:$0xf]
        %v1857 = vld [vmem:[#allocation17 + $0x64] sm:$0xf]
        %v1858 = vld [vmem:[#allocation17 + $0x68] sm:$0xf]
        %v1859 = vld [vmem:[#allocation17 + $0x6c] sm:$0xf]
        %v1860 = vld [vmem:[#allocation17 + $0x70] sm:$0xf]
        %v1861 = vld [vmem:[#allocation17 + $0x74] sm:$0xf]
        %v1862 = vld [vmem:[#allocation17 + $0x78] sm:$0xf]
        %v1863 = vld [vmem:[#allocation17 + $0x7c] sm:$0xf]
        %v1896 = vunpack.c.l.b16 %v1832
        %v1897 = vunpack.c.l.b16 %v1833
        %v1898 = vunpack.c.l.b16 %v1834
        %v1899 = vunpack.c.l.b16 %v1835
        %v1900 = vunpack.c.l.b16 %v1836
        %v1901 = vunpack.c.l.b16 %v1837
        %v1902 = vunpack.c.l.b16 %v1838
        %v1903 = vunpack.c.l.b16 %v1839
        %v1904 = vunpack.c.l.b16 %v1840
        %v1905 = vunpack.c.l.b16 %v1841
        %v1906 = vunpack.c.l.b16 %v1842
        %v1907 = vunpack.c.l.b16 %v1843
        %v1908 = vunpack.c.l.b16 %v1844
        %v1909 = vunpack.c.l.b16 %v1845
        %v1910 = vunpack.c.l.b16 %v1846
        %v1911 = vunpack.c.l.b16 %v1847
        %v1912 = vunpack.c.l.b16 %v1848
        %v1913 = vunpack.c.l.b16 %v1849
        %v1914 = vunpack.c.l.b16 %v1850
        %v1915 = vunpack.c.l.b16 %v1851
        %v1916 = vunpack.c.l.b16 %v1852
        %v1917 = vunpack.c.l.b16 %v1853
        %v1918 = vunpack.c.l.b16 %v1854
        %v1919 = vunpack.c.l.b16 %v1855
        %v1920 = vunpack.c.l.b16 %v1856
        %v1921 = vunpack.c.l.b16 %v1857
        %v1922 = vunpack.c.l.b16 %v1858
        %v1923 = vunpack.c.l.b16 %v1859
        %v1924 = vunpack.c.l.b16 %v1860
        %v1925 = vunpack.c.l.b16 %v1861
        %v1926 = vunpack.c.l.b16 %v1862
        %v1927 = vunpack.c.l.b16 %v1863
        %v1928 = vpack.c.b16 %v1897, %v1896
        %v1929 = vpack.c.b16 %v1899, %v1898
        %v1930 = vpack.c.b16 %v1901, %v1900
        %v1931 = vpack.c.b16 %v1903, %v1902
        %v1932 = vpack.c.b16 %v1905, %v1904
        %v1933 = vpack.c.b16 %v1907, %v1906
        %v1934 = vpack.c.b16 %v1909, %v1908
        %v1935 = vpack.c.b16 %v1911, %v1910
        %v1936 = vpack.c.b16 %v1913, %v1912
        %v1937 = vpack.c.b16 %v1915, %v1914
        %v1938 = vpack.c.b16 %v1917, %v1916
        %v1939 = vpack.c.b16 %v1919, %v1918
        %v1940 = vpack.c.b16 %v1921, %v1920
        %v1941 = vpack.c.b16 %v1923, %v1922
        %v1942 = vpack.c.b16 %v1925, %v1924
        %v1943 = vpack.c.b16 %v1927, %v1926
        %1960 = vmatprep.subr.bf16.mxu0 0
        %1961 = vmatpush1.bf16.msra.mxu0 %v1928
        %1962 = vmatprep.subr.bf16.mxu0 0
        %1963 = vmatpush1.bf16.msra.mxu0 %v1929
        %1964 = vmatprep.subr.bf16.mxu0 0
        %1965 = vmatpush1.bf16.msra.mxu0 %v1930
        %1966 = vmatprep.subr.bf16.mxu0 0
        %1967 = vmatpush1.bf16.msra.mxu0 %v1931
        %1968 = vmatprep.subr.bf16.mxu0 0
        %1969 = vmatpush1.bf16.msra.mxu0 %v1932
        %1970 = vmatprep.subr.bf16.mxu0 0
        %1971 = vmatpush1.bf16.msra.mxu0 %v1933
        %1972 = vmatprep.subr.bf16.mxu0 0
        %1973 = vmatpush1.bf16.msra.mxu0 %v1934
        %1974 = vmatprep.subr.bf16.mxu0 0
        %1975 = vmatpush1.bf16.msra.mxu0 %v1935
        %1976 = vmatprep.subr.bf16.mxu0 0
        %1977 = vmatpush1.bf16.msra.mxu0 %v1936
        %1978 = vmatprep.subr.bf16.mxu0 0
        %1979 = vmatpush1.bf16.msra.mxu0 %v1937
        %1980 = vmatprep.subr.bf16.mxu0 0
        %1981 = vmatpush1.bf16.msra.mxu0 %v1938
        %1982 = vmatprep.subr.bf16.mxu0 0
        %1983 = vmatpush1.bf16.msra.mxu0 %v1939
        %1984 = vmatprep.subr.bf16.mxu0 0
        %1985 = vmatpush1.bf16.msra.mxu0 %v1940
        %1986 = vmatprep.subr.bf16.mxu0 0
        %1987 = vmatpush1.bf16.msra.mxu0 %v1941
        %1988 = vmatprep.subr.bf16.mxu0 0
        %1989 = vmatpush1.bf16.msra.mxu0 %v1942
        %1990 = vmatprep.subr.bf16.mxu0 0
        %1991 = vmatpush1.bf16.msra.mxu0 %v1943
        %1992 = vmatprep.mubr.bf16.mxu0 %v1831
        %1993 = vmatmul.mubr.bf16.gmra.mrb[0].mxu0 %v1830
        %v1994 = vpop.f32.mrb[0].mxu0
        %v1995 = vadd.f32 0.0, %v1994
        %v1996 = vpop.f32.mrb[0].mxu0
        %v1997 = vpop.f32.mrb[0].mxu0
        %v1998 = vpop.f32.mrb[0].mxu0
        %1999 = vdwg.mxu0
        %v2000 = vmul.f32 %v1995, 0.7
        %v2001 = vadd.f32 %v1523, %v2000
        %2002 = vst [vmem:[%s580] sm:$0xff] %v2001
        %s2003 = sand.u32 %s321, 1
        %s2004 = scalar_lea.sflag [#allocation4], %s2003
        %s2005 = sand.u32 %s321, 1
        %s2006 = smul.addr %s2005, 8
        %s2007 = scalar_lea.vmem [#allocation19], %s2006
        // Predicated region
        $region113: #{tpu_custom_call.1} parent=71 // pred_check
          %p2008 = pneg %p331
        $region114: #{tpu_custom_call.1} parent=71 // pred_check_branch
          %2010 = sbr.rel (%p2008) target = $region116
        $region115: #{tpu_custom_call.1} parent=71 // pred_region
          %s2012 = ssub.s32 128, 128
          %2013 = vsyncadd %s2004, %s2012
          %s2014 = smul.addr %s35, 128
          %s2015 = scalar_lea.hbm %s13, %s2014
          %s2017 = sshll.u32 %s2007, 4
          %s2018 = int_to_ptr.vmem [resolvable:$true] %s2017
          %2020 = dma.vmem_to_hbm [thread:$0]  %s2018, 128, %s2015, %s2004
        $region116: #{tpu_custom_call.1} parent=71 // pred_fallthru
          _
      $region72: #{tpu_custom_call.1} parent=5 // pred_fallthru
        _
      %p2021 = scmp.le.s32.totalorder 2, %s30
      // Predicated region
      $region117: #{tpu_custom_call.1} parent=5 // pred_check
        %p2022 = pneg %p2021
      $region118: #{tpu_custom_call.1} parent=5 // pred_check_branch
        %2024 = sbr.rel (%p2022) target = $region120
      $region119: #{tpu_custom_call.1} parent=5 // pred_region
        %s2025 = ssub.s32 %s30, 2
        // Predicated region
        $region121: #{tpu_custom_call.1} parent=119 // pred_check
          %p2026 = pneg %p337
        $region122: #{tpu_custom_call.1} parent=119 // pred_check_branch
          %2028 = sbr.rel (%p2026) target = $region124
        $region123: #{tpu_custom_call.1} parent=119 // pred_region
          %s2029 = sand.u32 %s322, 1
          %s2030 = scalar_lea.sflag [#allocation4], %s2029
          %s2031 = sand.u32 %s322, 1
          %s2032 = smul.addr %s2031, 8
          %s2033 = scalar_lea.vmem [#allocation19], %s2032
          %2034 = dma.done %s2030, 128
        $region124: #{tpu_custom_call.1} parent=119 // pred_fallthru
          _
      $region120: #{tpu_custom_call.1} parent=5 // pred_fallthru
        _
    $region6: #{tpu_custom_call.1} parent=1 // loop_footer
      %s34 = sadd.s32 1, %s30
    $region7: #{tpu_custom_call.1} parent=1 // loop_footer_branch
      %29 = sbr.rel target = $region3
    $region8: #{tpu_custom_call.1} parent=1 // loop_exit
      _
    %2035 = vsyncpa [#allocation3], 1
    %s2036 = scalar_lea.sflag [#allocation3], 1
    %2037 = vsyncpa %s2036, 1
    %2038 = vsyncpa [#allocation6], 1
    %2039 = vsyncpa [#allocation9], 1
    %2040 = vsyncpa [#allocation12], 1
    %2041 = vsyncpa [#allocation15], 1
    %2042 = vsyncpa [#allocation18], 1
    %2043 = vsyncpa [#allocation4], 1
    %s2044 = scalar_lea.sflag [#allocation4], 1
    %2045 = vsyncpa %s2044, 1

</llo_original>
